<compile_context>
chip_gen: v7x
topology: tpu7x:2x2x1
jax: 0.10.0
libtpu: 0.0.40
codegen_flags: <defaults>
</compile_context>

<pallas_src>
import functools

import jax
import jax.numpy as jnp
from jax.experimental import pallas as pl
from jax.experimental.pallas import tpu as pltpu


def _conv_planes(xp, wdw_ref, wpw_ref, *, k, stride, dilation, ho, wo, c_in, c_out):
    """ReLU'd+padded image (C_in, Hp, Wp) -> list of C_out (Ho, Wo) pre-BN planes.

    Depthwise dilated conv followed by the pointwise 1x1 conv, both as lane-dense
    VPU multiply-accumulates with scalar weights read from SMEM."""
    dw = []
    for c in range(c_in):
        plane = xp[c]
        acc = None
        for kh in range(k):
            for kw in range(k):
                h0 = kh * dilation
                w0 = kw * dilation
                if stride == 1:
                    win = plane[h0:h0 + ho, w0:w0 + wo]
                else:
                    # TODO(synk): for stride>1 (DARTS reduction cells) a one-time
                    # even/odd column de-interleave would avoid 9 strided (XLU)
                    # slices; correct as written, just slower.
                    win = plane[h0:h0 + (ho - 1) * stride + 1:stride,
                                w0:w0 + (wo - 1) * stride + 1:stride]
                term = win * wdw_ref[c, kh * k + kw]
                acc = term if acc is None else acc + term
        dw.append(acc)

    hs = []
    for o in range(c_out):
        acc = None
        for c in range(c_in):
            term = dw[c] * wpw_ref[o, c]
            acc = term if acc is None else acc + term
        hs.append(acc)
    return hs


def _stats_kernel(x_ref, wdw_ref, wpw_ref, stats_ref, xp_ref, *,
                  k, stride, dilation, pad, h, w, ho, wo, c_in, c_out, tn):
    """Pass 1: per-tile BatchNorm partial sums (row-reduced sum / sum-of-squares)."""
    # Zero the padded scratch every step (border must be zero; cheap, and safe
    # even if the parallel batch axis is split across TensorCores).
    xp_ref[...] = jnp.zeros_like(xp_ref)

    vsum = [jnp.zeros((wo,), jnp.float32) for _ in range(c_out)]
    vsq = [jnp.zeros((wo,), jnp.float32) for _ in range(c_out)]
    for n in range(tn):
        # ReLU then place into the padded interior (relu -> pad == pad -> relu
        # since ReLU(0) == 0), matching the reference relu -> conv-with-padding.
        xp_ref[:, pad:pad + h, pad:pad + w] = jnp.maximum(x_ref[n], 0.0)
        hs = _conv_planes(xp_ref[...], wdw_ref, wpw_ref, k=k, stride=stride,
                          dilation=dilation, ho=ho, wo=wo, c_in=c_in, c_out=c_out)
        for o in range(c_out):
            vsum[o] = vsum[o] + jnp.sum(hs[o], axis=0)          # (Wo,) sublane reduce
            vsq[o] = vsq[o] + jnp.sum(hs[o] * hs[o], axis=0)    # (Wo,)
    for o in range(c_out):
        stats_ref[0, o, 0, :] = vsum[o]
        stats_ref[0, o, 1, :] = vsq[o]


def _apply_kernel(x_ref, wdw_ref, wpw_ref, scsh_ref, o_ref, xp_ref, *,
                  k, stride, dilation, pad, h, w, ho, wo, c_in, c_out, tn):
    """Pass 2: recompute the cheap conv and apply the folded BN scale/shift."""
    xp_ref[...] = jnp.zeros_like(xp_ref)
    for n in range(tn):
        xp_ref[:, pad:pad + h, pad:pad + w] = jnp.maximum(x_ref[n], 0.0)
        hs = _conv_planes(xp_ref[...], wdw_ref, wpw_ref, k=k, stride=stride,
                          dilation=dilation, ho=ho, wo=wo, c_in=c_in, c_out=c_out)
        for o in range(c_out):
            o_ref[n, o] = hs[o] * scsh_ref[0, o] + scsh_ref[1, o]   # 1 FMA / element


def _pick_images_per_step(n, per_image_bytes, vmem_budget_bytes):
    """Largest images-per-step that divides N, keeps >=2 grid points when N>=2
    (two TensorCores on v7x), and stays under the per-step VMEM budget."""
    tn = max(1, n // 2)
    while tn > 1 and (n % tn != 0 or tn * per_image_bytes > vmem_budget_bytes):
        tn -= 1
    return tn


def _smem_spec():
    return pl.BlockSpec(memory_space=pltpu.MemorySpace.SMEM)


def dil_conv(x_nchw, params, *, kernel_size, stride, padding, dilation,
             eps=1e-5, images_per_step=None):
    """DilConv forward. x_nchw: (N, C_in, H, W) f32. Returns (N, C_out, Ho, Wo) f32."""
    N, C_in, H, W = x_nchw.shape
    k, d, s, p = kernel_size, dilation, stride, padding
    C_out = params["pw_w"].shape[0]
    Ho = (H + 2 * p - d * (k - 1) - 1) // s + 1
    Wo = (W + 2 * p - d * (k - 1) - 1) // s + 1
    Hp, Wp = H + 2 * p, W + 2 * p

    x = x_nchw.astype(jnp.float32)
    # Small weight tables live in SMEM and are read as scalars inside the kernels.
    wdw = params["dw_w"].reshape(C_in, k * k).astype(jnp.float32)     # (C_in, k*k)
    wpw = params["pw_w"].reshape(C_out, C_in).astype(jnp.float32)     # (C_out, C_in)
    gamma = params.get("bn_g")
    beta = params.get("bn_b")
    gamma = (jnp.ones((C_out,), jnp.float32) if gamma is None
             else gamma.reshape(C_out).astype(jnp.float32))
    beta = (jnp.zeros((C_out,), jnp.float32) if beta is None
            else beta.reshape(C_out).astype(jnp.float32))

    per_image_bytes = 4 * (C_in * H * W + C_out * Ho * Wo)
    tn = images_per_step or _pick_images_per_step(N, per_image_bytes, 8 << 20)
    assert N % tn == 0, "images_per_step must divide the batch"
    G = N // tn

    xp_bytes = 4 * C_in * Hp * Wp
    vmem_limit = int(min(64 << 20, max(16 << 20, 4 * tn * per_image_bytes + 2 * xp_bytes)))
    cparams = pltpu.CompilerParams(dimension_semantics=("parallel",),
                                   vmem_limit_bytes=vmem_limit)

    common = dict(k=k, stride=s, dilation=d, pad=p, h=H, w=W, ho=Ho, wo=Wo,
                  c_in=C_in, c_out=C_out, tn=tn)

    # ---- Pass 1: tiny per-tile BN partial sums (no intermediate h written). ----
    stats = pl.pallas_call(
        functools.partial(_stats_kernel, **common),
        grid=(G,),
        in_specs=[pl.BlockSpec((tn, C_in, H, W), lambda i: (i, 0, 0, 0)),
                  _smem_spec(), _smem_spec()],
        out_specs=pl.BlockSpec((1, C_out, 2, Wo), lambda i: (i, 0, 0, 0)),
        out_shape=jax.ShapeDtypeStruct((G, C_out, 2, Wo), jnp.float32),
        scratch_shapes=[pltpu.VMEM((C_in, Hp, Wp), jnp.float32)],
        compiler_params=cparams,
    )(x, wdw, wpw)

    # ---- Fold whole-batch train-mode BN into one scale/shift (tiny XLA ops). ----
    cnt = float(N * Ho * Wo)
    ssum = jnp.sum(stats[:, :, 0, :], axis=(0, 2))
    ssq = jnp.sum(stats[:, :, 1, :], axis=(0, 2))
    mean = ssum / cnt
    # Biased variance, as torch uses for training-mode normalization.
    # TODO(synk): E[h^2]-E[h]^2 in f32 is fine at these sizes; use Welford-style
    # centered partials if N*Ho*Wo becomes very large.
    var = ssq / cnt - mean * mean
    scale = gamma * jax.lax.rsqrt(var + eps)
    shift = beta - mean * scale
    scsh = jnp.stack([scale, shift], axis=0)                          # (2, C_out)

    # ---- Pass 2: recompute conv, apply fused BN, write NCHW output directly. ----
    y = pl.pallas_call(
        functools.partial(_apply_kernel, **common),
        grid=(G,),
        in_specs=[pl.BlockSpec((tn, C_in, H, W), lambda i: (i, 0, 0, 0)),
                  _smem_spec(), _smem_spec(), _smem_spec()],
        out_specs=pl.BlockSpec((tn, C_out, Ho, Wo), lambda i: (i, 0, 0, 0)),
        out_shape=jax.ShapeDtypeStruct((N, C_out, Ho, Wo), jnp.float32),
        scratch_shapes=[pltpu.VMEM((C_in, Hp, Wp), jnp.float32)],
        compiler_params=cparams,
    )(x, wdw, wpw, scsh)

    return y


def _reference(x_nchw, params, *, stride, padding, dilation, eps=1e-5):
    """Pure-XLA reference of the same forward (for an in-script sanity check)."""
    x = jnp.maximum(x_nchw, 0.0)
    y = jax.lax.conv_general_dilated(
        x, params["dw_w"], window_strides=(stride, stride),
        padding=[(padding, padding), (padding, padding)],
        rhs_dilation=(dilation, dilation),
        dimension_numbers=("NCHW", "OIHW", "NCHW"),
        feature_group_count=x.shape[1])
    y = jax.lax.conv_general_dilated(
        y, params["pw_w"], window_strides=(1, 1), padding="VALID",
        dimension_numbers=("NCHW", "OIHW", "NCHW"))
    m = jnp.mean(y, axis=(0, 2, 3), keepdims=True)
    v = jnp.mean((y - m) ** 2, axis=(0, 2, 3), keepdims=True)
    g = params["bn_g"].reshape(1, -1, 1, 1)
    b = params["bn_b"].reshape(1, -1, 1, 1)
    return (y - m) * jax.lax.rsqrt(v + eps) * g + b


if __name__ == "__main__":
    key = jax.random.PRNGKey(0)
    kx, kdw, kpw, kg, kb = jax.random.split(key, 5)

    # DARTS dil_conv_3x3 config: kernel 3, stride 1, padding 2, dilation 2.
    N, C_in, C_out, H, W = 2, 4, 8, 16, 16
    k, stride, padding, dilation = 3, 1, 2, 2

    x = jax.random.normal(kx, (N, C_in, H, W), jnp.float32)
    params = {
        "dw_w": 0.3 * jax.random.normal(kdw, (C_in, 1, k, k), jnp.float32),
        "pw_w": 0.3 * jax.random.normal(kpw, (C_out, C_in, 1, 1), jnp.float32),
        "bn_g": 1.0 + 0.1 * jax.random.normal(kg, (C_out,), jnp.float32),
        "bn_b": 0.1 * jax.random.normal(kb, (C_out,), jnp.float32),
    }

    out = dil_conv(x, params, kernel_size=k, stride=stride,
                   padding=padding, dilation=dilation)
    out = jax.block_until_ready(out)

    ref = _reference(x, params, stride=stride, padding=padding, dilation=dilation)
    assert out.shape == (N, C_out, H, W), out.shape
    assert bool(jnp.all(jnp.isfinite(out)))
    err = float(jnp.max(jnp.abs(out - ref)))
    assert err < 1e-3, f"mismatch vs XLA reference: {err}"
    print("KERNEL_OK")
</pallas_src>

<mosaic_0001>
module attributes {stable_mosaic.version = 11 : i64} {
  func.func @_stats_kernel(%arg0: i32, %arg1: memref<1x4x16x16xf32, #tpu.memory_space<vmem>>, %arg2: memref<4x9xf32, #tpu.memory_space<smem>>, %arg3: memref<8x4xf32, #tpu.memory_space<smem>>, %arg4: memref<1x8x2x16xf32, #tpu.memory_space<vmem>>, %arg5: memref<4x20x20xf32, #tpu.memory_space<vmem>>) attributes {dimension_semantics = [#tpu.dimension_semantics<parallel>], iteration_bounds = array<i64: 2>, scalar_prefetch = 0 : i64, scratch_operands = 1 : i64, tpu.core_type = #tpu.core_type<tc>, window_params = [{transform_indices = @transform_0, window_bounds = array<i64: 1, 4, 16, 16>}, {transform_indices = @transform_1, window_bounds = array<i64: 4, 9>}, {transform_indices = @transform_2, window_bounds = array<i64: 8, 4>}, {transform_indices = @transform_3, window_bounds = array<i64: 1, 8, 2, 16>}]} {
    %cst = arith.constant 0.000000e+00 : f32
    %0 = vector.broadcast %cst : f32 to vector<4x20x20xf32>
    %c0 = arith.constant 0 : index
    %c0_0 = arith.constant 0 : index
    %c0_1 = arith.constant 0 : index
    %1 = vector.load %arg5[%c0, %c0_0, %c0_1] : memref<4x20x20xf32, #tpu.memory_space<vmem>>, vector<4x20x20xf32>
    tpu.vector_store %arg5[%c0, %c0_0, %c0_1], %0 {strides = array<i32>} : memref<4x20x20xf32, #tpu.memory_space<vmem>>, vector<4x20x20xf32>,
    %cst_2 = arith.constant 0.000000e+00 : f32
    %2 = vector.broadcast %cst_2 : f32 to vector<16xf32>
    %cst_3 = arith.constant 0.000000e+00 : f32
    %3 = vector.broadcast %cst_3 : f32 to vector<16xf32>
    %cst_4 = arith.constant 0.000000e+00 : f32
    %4 = vector.broadcast %cst_4 : f32 to vector<16xf32>
    %cst_5 = arith.constant 0.000000e+00 : f32
    %5 = vector.broadcast %cst_5 : f32 to vector<16xf32>
    %cst_6 = arith.constant 0.000000e+00 : f32
    %6 = vector.broadcast %cst_6 : f32 to vector<16xf32>
    %cst_7 = arith.constant 0.000000e+00 : f32
    %7 = vector.broadcast %cst_7 : f32 to vector<16xf32>
    %cst_8 = arith.constant 0.000000e+00 : f32
    %8 = vector.broadcast %cst_8 : f32 to vector<16xf32>
    %cst_9 = arith.constant 0.000000e+00 : f32
    %9 = vector.broadcast %cst_9 : f32 to vector<16xf32>
    %cst_10 = arith.constant 0.000000e+00 : f32
    %10 = vector.broadcast %cst_10 : f32 to vector<16xf32>
    %cst_11 = arith.constant 0.000000e+00 : f32
    %11 = vector.broadcast %cst_11 : f32 to vector<16xf32>
    %cst_12 = arith.constant 0.000000e+00 : f32
    %12 = vector.broadcast %cst_12 : f32 to vector<16xf32>
    %cst_13 = arith.constant 0.000000e+00 : f32
    %13 = vector.broadcast %cst_13 : f32 to vector<16xf32>
    %cst_14 = arith.constant 0.000000e+00 : f32
    %14 = vector.broadcast %cst_14 : f32 to vector<16xf32>
    %cst_15 = arith.constant 0.000000e+00 : f32
    %15 = vector.broadcast %cst_15 : f32 to vector<16xf32>
    %cst_16 = arith.constant 0.000000e+00 : f32
    %16 = vector.broadcast %cst_16 : f32 to vector<16xf32>
    %cst_17 = arith.constant 0.000000e+00 : f32
    %17 = vector.broadcast %cst_17 : f32 to vector<16xf32>
    %c0_18 = arith.constant 0 : index
    %c0_19 = arith.constant 0 : index
    %c0_20 = arith.constant 0 : index
    %c0_21 = arith.constant 0 : index
    %18 = vector.load %arg1[%c0_18, %c0_19, %c0_20, %c0_21] : memref<1x4x16x16xf32, #tpu.memory_space<vmem>>, vector<1x4x16x16xf32>
    %19 = vector.shape_cast %18 : vector<1x4x16x16xf32> to vector<4x16x16xf32>
    %cst_22 = arith.constant 0.000000e+00 : f32
    %20 = vector.broadcast %cst_22 : f32 to vector<4x16x16xf32>
    %21 = arith.maximumf %19, %20 : vector<4x16x16xf32>
    %c0_23 = arith.constant 0 : index
    %c2 = arith.constant 2 : index
    %c2_24 = arith.constant 2 : index
    %22 = vector.load %arg5[%c0_23, %c2, %c2_24] : memref<4x20x20xf32, #tpu.memory_space<vmem>>, vector<4x16x16xf32>
    tpu.vector_store %arg5[%c0_23, %c2, %c2_24], %21 {strides = array<i32>} : memref<4x20x20xf32, #tpu.memory_space<vmem>>, vector<4x16x16xf32>,
    %c0_25 = arith.constant 0 : index
    %c0_26 = arith.constant 0 : index
    %c0_27 = arith.constant 0 : index
    %23 = vector.load %arg5[%c0_25, %c0_26, %c0_27] : memref<4x20x20xf32, #tpu.memory_space<vmem>>, vector<4x20x20xf32>
    %24 = vector.extract_strided_slice %23 {offsets = [0, 0, 0], sizes = [1, 20, 20], strides = [1, 1, 1]} : vector<4x20x20xf32> to vector<1x20x20xf32>
    %25 = vector.shape_cast %24 : vector<1x20x20xf32> to vector<20x20xf32>
    %26 = vector.extract_strided_slice %25 {offsets = [0, 0], sizes = [16, 16], strides = [1, 1]} : vector<20x20xf32> to vector<16x16xf32>
    %c0_28 = arith.constant 0 : index
    %c0_29 = arith.constant 0 : index
    %27 = memref.load %arg2[%c0_28, %c0_29] : memref<4x9xf32, #tpu.memory_space<smem>>
    %28 = vector.broadcast %27 : f32 to vector<16x16xf32>
    %29 = arith.mulf %26, %28 : vector<16x16xf32>
    %30 = vector.extract_strided_slice %25 {offsets = [0, 2], sizes = [16, 16], strides = [1, 1]} : vector<20x20xf32> to vector<16x16xf32>
    %c0_30 = arith.constant 0 : index
    %c1 = arith.constant 1 : index
    %31 = memref.load %arg2[%c0_30, %c1] : memref<4x9xf32, #tpu.memory_space<smem>>
    %32 = vector.broadcast %31 : f32 to vector<16x16xf32>
    %33 = arith.mulf %30, %32 : vector<16x16xf32>
    %34 = arith.addf %29, %33 : vector<16x16xf32>
    %35 = vector.extract_strided_slice %25 {offsets = [0, 4], sizes = [16, 16], strides = [1, 1]} : vector<20x20xf32> to vector<16x16xf32>
    %c0_31 = arith.constant 0 : index
    %c2_32 = arith.constant 2 : index
    %36 = memref.load %arg2[%c0_31, %c2_32] : memref<4x9xf32, #tpu.memory_space<smem>>
    %37 = vector.broadcast %36 : f32 to vector<16x16xf32>
    %38 = arith.mulf %35, %37 : vector<16x16xf32>
    %39 = arith.addf %34, %38 : vector<16x16xf32>
    %40 = vector.extract_strided_slice %25 {offsets = [2, 0], sizes = [16, 16], strides = [1, 1]} : vector<20x20xf32> to vector<16x16xf32>
    %c0_33 = arith.constant 0 : index
    %c3 = arith.constant 3 : index
    %41 = memref.load %arg2[%c0_33, %c3] : memref<4x9xf32, #tpu.memory_space<smem>>
    %42 = vector.broadcast %41 : f32 to vector<16x16xf32>
    %43 = arith.mulf %40, %42 : vector<16x16xf32>
    %44 = arith.addf %39, %43 : vector<16x16xf32>
    %45 = vector.extract_strided_slice %25 {offsets = [2, 2], sizes = [16, 16], strides = [1, 1]} : vector<20x20xf32> to vector<16x16xf32>
    %c0_34 = arith.constant 0 : index
    %c4 = arith.constant 4 : index
    %46 = memref.load %arg2[%c0_34, %c4] : memref<4x9xf32, #tpu.memory_space<smem>>
    %47 = vector.broadcast %46 : f32 to vector<16x16xf32>
    %48 = arith.mulf %45, %47 : vector<16x16xf32>
    %49 = arith.addf %44, %48 : vector<16x16xf32>
    %50 = vector.extract_strided_slice %25 {offsets = [2, 4], sizes = [16, 16], strides = [1, 1]} : vector<20x20xf32> to vector<16x16xf32>
    %c0_35 = arith.constant 0 : index
    %c5 = arith.constant 5 : index
    %51 = memref.load %arg2[%c0_35, %c5] : memref<4x9xf32, #tpu.memory_space<smem>>
    %52 = vector.broadcast %51 : f32 to vector<16x16xf32>
    %53 = arith.mulf %50, %52 : vector<16x16xf32>
    %54 = arith.addf %49, %53 : vector<16x16xf32>
    %55 = vector.extract_strided_slice %25 {offsets = [4, 0], sizes = [16, 16], strides = [1, 1]} : vector<20x20xf32> to vector<16x16xf32>
    %c0_36 = arith.constant 0 : index
    %c6 = arith.constant 6 : index
    %56 = memref.load %arg2[%c0_36, %c6] : memref<4x9xf32, #tpu.memory_space<smem>>
    %57 = vector.broadcast %56 : f32 to vector<16x16xf32>
    %58 = arith.mulf %55, %57 : vector<16x16xf32>
    %59 = arith.addf %54, %58 : vector<16x16xf32>
    %60 = vector.extract_strided_slice %25 {offsets = [4, 2], sizes = [16, 16], strides = [1, 1]} : vector<20x20xf32> to vector<16x16xf32>
    %c0_37 = arith.constant 0 : index
    %c7 = arith.constant 7 : index
    %61 = memref.load %arg2[%c0_37, %c7] : memref<4x9xf32, #tpu.memory_space<smem>>
    %62 = vector.broadcast %61 : f32 to vector<16x16xf32>
    %63 = arith.mulf %60, %62 : vector<16x16xf32>
    %64 = arith.addf %59, %63 : vector<16x16xf32>
    %65 = vector.extract_strided_slice %25 {offsets = [4, 4], sizes = [16, 16], strides = [1, 1]} : vector<20x20xf32> to vector<16x16xf32>
    %c0_38 = arith.constant 0 : index
    %c8 = arith.constant 8 : index
    %66 = memref.load %arg2[%c0_38, %c8] : memref<4x9xf32, #tpu.memory_space<smem>>
    %67 = vector.broadcast %66 : f32 to vector<16x16xf32>
    %68 = arith.mulf %65, %67 : vector<16x16xf32>
    %69 = arith.addf %64, %68 : vector<16x16xf32>
    %70 = vector.extract_strided_slice %23 {offsets = [1, 0, 0], sizes = [1, 20, 20], strides = [1, 1, 1]} : vector<4x20x20xf32> to vector<1x20x20xf32>
    %71 = vector.shape_cast %70 : vector<1x20x20xf32> to vector<20x20xf32>
    %72 = vector.extract_strided_slice %71 {offsets = [0, 0], sizes = [16, 16], strides = [1, 1]} : vector<20x20xf32> to vector<16x16xf32>
    %c1_39 = arith.constant 1 : index
    %c0_40 = arith.constant 0 : index
    %73 = memref.load %arg2[%c1_39, %c0_40] : memref<4x9xf32, #tpu.memory_space<smem>>
    %74 = vector.broadcast %73 : f32 to vector<16x16xf32>
    %75 = arith.mulf %72, %74 : vector<16x16xf32>
    %76 = vector.extract_strided_slice %71 {offsets = [0, 2], sizes = [16, 16], strides = [1, 1]} : vector<20x20xf32> to vector<16x16xf32>
    %c1_41 = arith.constant 1 : index
    %c1_42 = arith.constant 1 : index
    %77 = memref.load %arg2[%c1_41, %c1_42] : memref<4x9xf32, #tpu.memory_space<smem>>
    %78 = vector.broadcast %77 : f32 to vector<16x16xf32>
    %79 = arith.mulf %76, %78 : vector<16x16xf32>
    %80 = arith.addf %75, %79 : vector<16x16xf32>
    %81 = vector.extract_strided_slice %71 {offsets = [0, 4], sizes = [16, 16], strides = [1, 1]} : vector<20x20xf32> to vector<16x16xf32>
    %c1_43 = arith.constant 1 : index
    %c2_44 = arith.constant 2 : index
    %82 = memref.load %arg2[%c1_43, %c2_44] : memref<4x9xf32, #tpu.memory_space<smem>>
    %83 = vector.broadcast %82 : f32 to vector<16x16xf32>
    %84 = arith.mulf %81, %83 : vector<16x16xf32>
    %85 = arith.addf %80, %84 : vector<16x16xf32>
    %86 = vector.extract_strided_slice %71 {offsets = [2, 0], sizes = [16, 16], strides = [1, 1]} : vector<20x20xf32> to vector<16x16xf32>
    %c1_45 = arith.constant 1 : index
    %c3_46 = arith.constant 3 : index
    %87 = memref.load %arg2[%c1_45, %c3_46] : memref<4x9xf32, #tpu.memory_space<smem>>
    %88 = vector.broadcast %87 : f32 to vector<16x16xf32>
    %89 = arith.mulf %86, %88 : vector<16x16xf32>
    %90 = arith.addf %85, %89 : vector<16x16xf32>
    %91 = vector.extract_strided_slice %71 {offsets = [2, 2], sizes = [16, 16], strides = [1, 1]} : vector<20x20xf32> to vector<16x16xf32>
    %c1_47 = arith.constant 1 : index
    %c4_48 = arith.constant 4 : index
    %92 = memref.load %arg2[%c1_47, %c4_48] : memref<4x9xf32, #tpu.memory_space<smem>>
    %93 = vector.broadcast %92 : f32 to vector<16x16xf32>
    %94 = arith.mulf %91, %93 : vector<16x16xf32>
    %95 = arith.addf %90, %94 : vector<16x16xf32>
    %96 = vector.extract_strided_slice %71 {offsets = [2, 4], sizes = [16, 16], strides = [1, 1]} : vector<20x20xf32> to vector<16x16xf32>
    %c1_49 = arith.constant 1 : index
    %c5_50 = arith.constant 5 : index
    %97 = memref.load %arg2[%c1_49, %c5_50] : memref<4x9xf32, #tpu.memory_space<smem>>
    %98 = vector.broadcast %97 : f32 to vector<16x16xf32>
    %99 = arith.mulf %96, %98 : vector<16x16xf32>
    %100 = arith.addf %95, %99 : vector<16x16xf32>
    %101 = vector.extract_strided_slice %71 {offsets = [4, 0], sizes = [16, 16], strides = [1, 1]} : vector<20x20xf32> to vector<16x16xf32>
    %c1_51 = arith.constant 1 : index
    %c6_52 = arith.constant 6 : index
    %102 = memref.load %arg2[%c1_51, %c6_52] : memref<4x9xf32, #tpu.memory_space<smem>>
    %103 = vector.broadcast %102 : f32 to vector<16x16xf32>
    %104 = arith.mulf %101, %103 : vector<16x16xf32>
    %105 = arith.addf %100, %104 : vector<16x16xf32>
    %106 = vector.extract_strided_slice %71 {offsets = [4, 2], sizes = [16, 16], strides = [1, 1]} : vector<20x20xf32> to vector<16x16xf32>
    %c1_53 = arith.constant 1 : index
    %c7_54 = arith.constant 7 : index
    %107 = memref.load %arg2[%c1_53, %c7_54] : memref<4x9xf32, #tpu.memory_space<smem>>
    %108 = vector.broadcast %107 : f32 to vector<16x16xf32>
    %109 = arith.mulf %106, %108 : vector<16x16xf32>
    %110 = arith.addf %105, %109 : vector<16x16xf32>
    %111 = vector.extract_strided_slice %71 {offsets = [4, 4], sizes = [16, 16], strides = [1, 1]} : vector<20x20xf32> to vector<16x16xf32>
    %c1_55 = arith.constant 1 : index
    %c8_56 = arith.constant 8 : index
    %112 = memref.load %arg2[%c1_55, %c8_56] : memref<4x9xf32, #tpu.memory_space<smem>>
    %113 = vector.broadcast %112 : f32 to vector<16x16xf32>
    %114 = arith.mulf %111, %113 : vector<16x16xf32>
    %115 = arith.addf %110, %114 : vector<16x16xf32>
    %116 = vector.extract_strided_slice %23 {offsets = [2, 0, 0], sizes = [1, 20, 20], strides = [1, 1, 1]} : vector<4x20x20xf32> to vector<1x20x20xf32>
    %117 = vector.shape_cast %116 : vector<1x20x20xf32> to vector<20x20xf32>
    %118 = vector.extract_strided_slice %117 {offsets = [0, 0], sizes = [16, 16], strides = [1, 1]} : vector<20x20xf32> to vector<16x16xf32>
    %c2_57 = arith.constant 2 : index
    %c0_58 = arith.constant 0 : index
    %119 = memref.load %arg2[%c2_57, %c0_58] : memref<4x9xf32, #tpu.memory_space<smem>>
    %120 = vector.broadcast %119 : f32 to vector<16x16xf32>
    %121 = arith.mulf %118, %120 : vector<16x16xf32>
    %122 = vector.extract_strided_slice %117 {offsets = [0, 2], sizes = [16, 16], strides = [1, 1]} : vector<20x20xf32> to vector<16x16xf32>
    %c2_59 = arith.constant 2 : index
    %c1_60 = arith.constant 1 : index
    %123 = memref.load %arg2[%c2_59, %c1_60] : memref<4x9xf32, #tpu.memory_space<smem>>
    %124 = vector.broadcast %123 : f32 to vector<16x16xf32>
    %125 = arith.mulf %122, %124 : vector<16x16xf32>
    %126 = arith.addf %121, %125 : vector<16x16xf32>
    %127 = vector.extract_strided_slice %117 {offsets = [0, 4], sizes = [16, 16], strides = [1, 1]} : vector<20x20xf32> to vector<16x16xf32>
    %c2_61 = arith.constant 2 : index
    %c2_62 = arith.constant 2 : index
    %128 = memref.load %arg2[%c2_61, %c2_62] : memref<4x9xf32, #tpu.memory_space<smem>>
    %129 = vector.broadcast %128 : f32 to vector<16x16xf32>
    %130 = arith.mulf %127, %129 : vector<16x16xf32>
    %131 = arith.addf %126, %130 : vector<16x16xf32>
    %132 = vector.extract_strided_slice %117 {offsets = [2, 0], sizes = [16, 16], strides = [1, 1]} : vector<20x20xf32> to vector<16x16xf32>
    %c2_63 = arith.constant 2 : index
    %c3_64 = arith.constant 3 : index
    %133 = memref.load %arg2[%c2_63, %c3_64] : memref<4x9xf32, #tpu.memory_space<smem>>
    %134 = vector.broadcast %133 : f32 to vector<16x16xf32>
    %135 = arith.mulf %132, %134 : vector<16x16xf32>
    %136 = arith.addf %131, %135 : vector<16x16xf32>
    %137 = vector.extract_strided_slice %117 {offsets = [2, 2], sizes = [16, 16], strides = [1, 1]} : vector<20x20xf32> to vector<16x16xf32>
    %c2_65 = arith.constant 2 : index
    %c4_66 = arith.constant 4 : index
    %138 = memref.load %arg2[%c2_65, %c4_66] : memref<4x9xf32, #tpu.memory_space<smem>>
    %139 = vector.broadcast %138 : f32 to vector<16x16xf32>
    %140 = arith.mulf %137, %139 : vector<16x16xf32>
    %141 = arith.addf %136, %140 : vector<16x16xf32>
    %142 = vector.extract_strided_slice %117 {offsets = [2, 4], sizes = [16, 16], strides = [1, 1]} : vector<20x20xf32> to vector<16x16xf32>
    %c2_67 = arith.constant 2 : index
    %c5_68 = arith.constant 5 : index
    %143 = memref.load %arg2[%c2_67, %c5_68] : memref<4x9xf32, #tpu.memory_space<smem>>
    %144 = vector.broadcast %143 : f32 to vector<16x16xf32>
    %145 = arith.mulf %142, %144 : vector<16x16xf32>
    %146 = arith.addf %141, %145 : vector<16x16xf32>
    %147 = vector.extract_strided_slice %117 {offsets = [4, 0], sizes = [16, 16], strides = [1, 1]} : vector<20x20xf32> to vector<16x16xf32>
    %c2_69 = arith.constant 2 : index
    %c6_70 = arith.constant 6 : index
    %148 = memref.load %arg2[%c2_69, %c6_70] : memref<4x9xf32, #tpu.memory_space<smem>>
    %149 = vector.broadcast %148 : f32 to vector<16x16xf32>
    %150 = arith.mulf %147, %149 : vector<16x16xf32>
    %151 = arith.addf %146, %150 : vector<16x16xf32>
    %152 = vector.extract_strided_slice %117 {offsets = [4, 2], sizes = [16, 16], strides = [1, 1]} : vector<20x20xf32> to vector<16x16xf32>
    %c2_71 = arith.constant 2 : index
    %c7_72 = arith.constant 7 : index
    %153 = memref.load %arg2[%c2_71, %c7_72] : memref<4x9xf32, #tpu.memory_space<smem>>
    %154 = vector.broadcast %153 : f32 to vector<16x16xf32>
    %155 = arith.mulf %152, %154 : vector<16x16xf32>
    %156 = arith.addf %151, %155 : vector<16x16xf32>
    %157 = vector.extract_strided_slice %117 {offsets = [4, 4], sizes = [16, 16], strides = [1, 1]} : vector<20x20xf32> to vector<16x16xf32>
    %c2_73 = arith.constant 2 : index
    %c8_74 = arith.constant 8 : index
    %158 = memref.load %arg2[%c2_73, %c8_74] : memref<4x9xf32, #tpu.memory_space<smem>>
    %159 = vector.broadcast %158 : f32 to vector<16x16xf32>
    %160 = arith.mulf %157, %159 : vector<16x16xf32>
    %161 = arith.addf %156, %160 : vector<16x16xf32>
    %162 = vector.extract_strided_slice %23 {offsets = [3, 0, 0], sizes = [1, 20, 20], strides = [1, 1, 1]} : vector<4x20x20xf32> to vector<1x20x20xf32>
    %163 = vector.shape_cast %162 : vector<1x20x20xf32> to vector<20x20xf32>
    %164 = vector.extract_strided_slice %163 {offsets = [0, 0], sizes = [16, 16], strides = [1, 1]} : vector<20x20xf32> to vector<16x16xf32>
    %c3_75 = arith.constant 3 : index
    %c0_76 = arith.constant 0 : index
    %165 = memref.load %arg2[%c3_75, %c0_76] : memref<4x9xf32, #tpu.memory_space<smem>>
    %166 = vector.broadcast %165 : f32 to vector<16x16xf32>
    %167 = arith.mulf %164, %166 : vector<16x16xf32>
    %168 = vector.extract_strided_slice %163 {offsets = [0, 2], sizes = [16, 16], strides = [1, 1]} : vector<20x20xf32> to vector<16x16xf32>
    %c3_77 = arith.constant 3 : index
    %c1_78 = arith.constant 1 : index
    %169 = memref.load %arg2[%c3_77, %c1_78] : memref<4x9xf32, #tpu.memory_space<smem>>
    %170 = vector.broadcast %169 : f32 to vector<16x16xf32>
    %171 = arith.mulf %168, %170 : vector<16x16xf32>
    %172 = arith.addf %167, %171 : vector<16x16xf32>
    %173 = vector.extract_strided_slice %163 {offsets = [0, 4], sizes = [16, 16], strides = [1, 1]} : vector<20x20xf32> to vector<16x16xf32>
    %c3_79 = arith.constant 3 : index
    %c2_80 = arith.constant 2 : index
    %174 = memref.load %arg2[%c3_79, %c2_80] : memref<4x9xf32, #tpu.memory_space<smem>>
    %175 = vector.broadcast %174 : f32 to vector<16x16xf32>
    %176 = arith.mulf %173, %175 : vector<16x16xf32>
    %177 = arith.addf %172, %176 : vector<16x16xf32>
    %178 = vector.extract_strided_slice %163 {offsets = [2, 0], sizes = [16, 16], strides = [1, 1]} : vector<20x20xf32> to vector<16x16xf32>
    %c3_81 = arith.constant 3 : index
    %c3_82 = arith.constant 3 : index
    %179 = memref.load %arg2[%c3_81, %c3_82] : memref<4x9xf32, #tpu.memory_space<smem>>
    %180 = vector.broadcast %179 : f32 to vector<16x16xf32>
    %181 = arith.mulf %178, %180 : vector<16x16xf32>
    %182 = arith.addf %177, %181 : vector<16x16xf32>
    %183 = vector.extract_strided_slice %163 {offsets = [2, 2], sizes = [16, 16], strides = [1, 1]} : vector<20x20xf32> to vector<16x16xf32>
    %c3_83 = arith.constant 3 : index
    %c4_84 = arith.constant 4 : index
    %184 = memref.load %arg2[%c3_83, %c4_84] : memref<4x9xf32, #tpu.memory_space<smem>>
    %185 = vector.broadcast %184 : f32 to vector<16x16xf32>
    %186 = arith.mulf %183, %185 : vector<16x16xf32>
    %187 = arith.addf %182, %186 : vector<16x16xf32>
    %188 = vector.extract_strided_slice %163 {offsets = [2, 4], sizes = [16, 16], strides = [1, 1]} : vector<20x20xf32> to vector<16x16xf32>
    %c3_85 = arith.constant 3 : index
    %c5_86 = arith.constant 5 : index
    %189 = memref.load %arg2[%c3_85, %c5_86] : memref<4x9xf32, #tpu.memory_space<smem>>
    %190 = vector.broadcast %189 : f32 to vector<16x16xf32>
    %191 = arith.mulf %188, %190 : vector<16x16xf32>
    %192 = arith.addf %187, %191 : vector<16x16xf32>
    %193 = vector.extract_strided_slice %163 {offsets = [4, 0], sizes = [16, 16], strides = [1, 1]} : vector<20x20xf32> to vector<16x16xf32>
    %c3_87 = arith.constant 3 : index
    %c6_88 = arith.constant 6 : index
    %194 = memref.load %arg2[%c3_87, %c6_88] : memref<4x9xf32, #tpu.memory_space<smem>>
    %195 = vector.broadcast %194 : f32 to vector<16x16xf32>
    %196 = arith.mulf %193, %195 : vector<16x16xf32>
    %197 = arith.addf %192, %196 : vector<16x16xf32>
    %198 = vector.extract_strided_slice %163 {offsets = [4, 2], sizes = [16, 16], strides = [1, 1]} : vector<20x20xf32> to vector<16x16xf32>
    %c3_89 = arith.constant 3 : index
    %c7_90 = arith.constant 7 : index
    %199 = memref.load %arg2[%c3_89, %c7_90] : memref<4x9xf32, #tpu.memory_space<smem>>
    %200 = vector.broadcast %199 : f32 to vector<16x16xf32>
    %201 = arith.mulf %198, %200 : vector<16x16xf32>
    %202 = arith.addf %197, %201 : vector<16x16xf32>
    %203 = vector.extract_strided_slice %163 {offsets = [4, 4], sizes = [16, 16], strides = [1, 1]} : vector<20x20xf32> to vector<16x16xf32>
    %c3_91 = arith.constant 3 : index
    %c8_92 = arith.constant 8 : index
    %204 = memref.load %arg2[%c3_91, %c8_92] : memref<4x9xf32, #tpu.memory_space<smem>>
    %205 = vector.broadcast %204 : f32 to vector<16x16xf32>
    %206 = arith.mulf %203, %205 : vector<16x16xf32>
    %207 = arith.addf %202, %206 : vector<16x16xf32>
    %c0_93 = arith.constant 0 : index
    %c0_94 = arith.constant 0 : index
    %208 = memref.load %arg3[%c0_93, %c0_94] : memref<8x4xf32, #tpu.memory_space<smem>>
    %209 = vector.broadcast %208 : f32 to vector<16x16xf32>
    %210 = arith.mulf %69, %209 : vector<16x16xf32>
    %c0_95 = arith.constant 0 : index
    %c1_96 = arith.constant 1 : index
    %211 = memref.load %arg3[%c0_95, %c1_96] : memref<8x4xf32, #tpu.memory_space<smem>>
    %212 = vector.broadcast %211 : f32 to vector<16x16xf32>
    %213 = arith.mulf %115, %212 : vector<16x16xf32>
    %214 = arith.addf %210, %213 : vector<16x16xf32>
    %c0_97 = arith.constant 0 : index
    %c2_98 = arith.constant 2 : index
    %215 = memref.load %arg3[%c0_97, %c2_98] : memref<8x4xf32, #tpu.memory_space<smem>>
    %216 = vector.broadcast %215 : f32 to vector<16x16xf32>
    %217 = arith.mulf %161, %216 : vector<16x16xf32>
    %218 = arith.addf %214, %217 : vector<16x16xf32>
    %c0_99 = arith.constant 0 : index
    %c3_100 = arith.constant 3 : index
    %219 = memref.load %arg3[%c0_99, %c3_100] : memref<8x4xf32, #tpu.memory_space<smem>>
    %220 = vector.broadcast %219 : f32 to vector<16x16xf32>
    %221 = arith.mulf %207, %220 : vector<16x16xf32>
    %222 = arith.addf %218, %221 : vector<16x16xf32>
    %c1_101 = arith.constant 1 : index
    %c0_102 = arith.constant 0 : index
    %223 = memref.load %arg3[%c1_101, %c0_102] : memref<8x4xf32, #tpu.memory_space<smem>>
    %224 = vector.broadcast %223 : f32 to vector<16x16xf32>
    %225 = arith.mulf %69, %224 : vector<16x16xf32>
    %c1_103 = arith.constant 1 : index
    %c1_104 = arith.constant 1 : index
    %226 = memref.load %arg3[%c1_103, %c1_104] : memref<8x4xf32, #tpu.memory_space<smem>>
    %227 = vector.broadcast %226 : f32 to vector<16x16xf32>
    %228 = arith.mulf %115, %227 : vector<16x16xf32>
    %229 = arith.addf %225, %228 : vector<16x16xf32>
    %c1_105 = arith.constant 1 : index
    %c2_106 = arith.constant 2 : index
    %230 = memref.load %arg3[%c1_105, %c2_106] : memref<8x4xf32, #tpu.memory_space<smem>>
    %231 = vector.broadcast %230 : f32 to vector<16x16xf32>
    %232 = arith.mulf %161, %231 : vector<16x16xf32>
    %233 = arith.addf %229, %232 : vector<16x16xf32>
    %c1_107 = arith.constant 1 : index
    %c3_108 = arith.constant 3 : index
    %234 = memref.load %arg3[%c1_107, %c3_108] : memref<8x4xf32, #tpu.memory_space<smem>>
    %235 = vector.broadcast %234 : f32 to vector<16x16xf32>
    %236 = arith.mulf %207, %235 : vector<16x16xf32>
    %237 = arith.addf %233, %236 : vector<16x16xf32>
    %c2_109 = arith.constant 2 : index
    %c0_110 = arith.constant 0 : index
    %238 = memref.load %arg3[%c2_109, %c0_110] : memref<8x4xf32, #tpu.memory_space<smem>>
    %239 = vector.broadcast %238 : f32 to vector<16x16xf32>
    %240 = arith.mulf %69, %239 : vector<16x16xf32>
    %c2_111 = arith.constant 2 : index
    %c1_112 = arith.constant 1 : index
    %241 = memref.load %arg3[%c2_111, %c1_112] : memref<8x4xf32, #tpu.memory_space<smem>>
    %242 = vector.broadcast %241 : f32 to vector<16x16xf32>
    %243 = arith.mulf %115, %242 : vector<16x16xf32>
    %244 = arith.addf %240, %243 : vector<16x16xf32>
    %c2_113 = arith.constant 2 : index
    %c2_114 = arith.constant 2 : index
    %245 = memref.load %arg3[%c2_113, %c2_114] : memref<8x4xf32, #tpu.memory_space<smem>>
    %246 = vector.broadcast %245 : f32 to vector<16x16xf32>
    %247 = arith.mulf %161, %246 : vector<16x16xf32>
    %248 = arith.addf %244, %247 : vector<16x16xf32>
    %c2_115 = arith.constant 2 : index
    %c3_116 = arith.constant 3 : index
    %249 = memref.load %arg3[%c2_115, %c3_116] : memref<8x4xf32, #tpu.memory_space<smem>>
    %250 = vector.broadcast %249 : f32 to vector<16x16xf32>
    %251 = arith.mulf %207, %250 : vector<16x16xf32>
    %252 = arith.addf %248, %251 : vector<16x16xf32>
    %c3_117 = arith.constant 3 : index
    %c0_118 = arith.constant 0 : index
    %253 = memref.load %arg3[%c3_117, %c0_118] : memref<8x4xf32, #tpu.memory_space<smem>>
    %254 = vector.broadcast %253 : f32 to vector<16x16xf32>
    %255 = arith.mulf %69, %254 : vector<16x16xf32>
    %c3_119 = arith.constant 3 : index
    %c1_120 = arith.constant 1 : index
    %256 = memref.load %arg3[%c3_119, %c1_120] : memref<8x4xf32, #tpu.memory_space<smem>>
    %257 = vector.broadcast %256 : f32 to vector<16x16xf32>
    %258 = arith.mulf %115, %257 : vector<16x16xf32>
    %259 = arith.addf %255, %258 : vector<16x16xf32>
    %c3_121 = arith.constant 3 : index
    %c2_122 = arith.constant 2 : index
    %260 = memref.load %arg3[%c3_121, %c2_122] : memref<8x4xf32, #tpu.memory_space<smem>>
    %261 = vector.broadcast %260 : f32 to vector<16x16xf32>
    %262 = arith.mulf %161, %261 : vector<16x16xf32>
    %263 = arith.addf %259, %262 : vector<16x16xf32>
    %c3_123 = arith.constant 3 : index
    %c3_124 = arith.constant 3 : index
    %264 = memref.load %arg3[%c3_123, %c3_124] : memref<8x4xf32, #tpu.memory_space<smem>>
    %265 = vector.broadcast %264 : f32 to vector<16x16xf32>
    %266 = arith.mulf %207, %265 : vector<16x16xf32>
    %267 = arith.addf %263, %266 : vector<16x16xf32>
    %c4_125 = arith.constant 4 : index
    %c0_126 = arith.constant 0 : index
    %268 = memref.load %arg3[%c4_125, %c0_126] : memref<8x4xf32, #tpu.memory_space<smem>>
    %269 = vector.broadcast %268 : f32 to vector<16x16xf32>
    %270 = arith.mulf %69, %269 : vector<16x16xf32>
    %c4_127 = arith.constant 4 : index
    %c1_128 = arith.constant 1 : index
    %271 = memref.load %arg3[%c4_127, %c1_128] : memref<8x4xf32, #tpu.memory_space<smem>>
    %272 = vector.broadcast %271 : f32 to vector<16x16xf32>
    %273 = arith.mulf %115, %272 : vector<16x16xf32>
    %274 = arith.addf %270, %273 : vector<16x16xf32>
    %c4_129 = arith.constant 4 : index
    %c2_130 = arith.constant 2 : index
    %275 = memref.load %arg3[%c4_129, %c2_130] : memref<8x4xf32, #tpu.memory_space<smem>>
    %276 = vector.broadcast %275 : f32 to vector<16x16xf32>
    %277 = arith.mulf %161, %276 : vector<16x16xf32>
    %278 = arith.addf %274, %277 : vector<16x16xf32>
    %c4_131 = arith.constant 4 : index
    %c3_132 = arith.constant 3 : index
    %279 = memref.load %arg3[%c4_131, %c3_132] : memref<8x4xf32, #tpu.memory_space<smem>>
    %280 = vector.broadcast %279 : f32 to vector<16x16xf32>
    %281 = arith.mulf %207, %280 : vector<16x16xf32>
    %282 = arith.addf %278, %281 : vector<16x16xf32>
    %c5_133 = arith.constant 5 : index
    %c0_134 = arith.constant 0 : index
    %283 = memref.load %arg3[%c5_133, %c0_134] : memref<8x4xf32, #tpu.memory_space<smem>>
    %284 = vector.broadcast %283 : f32 to vector<16x16xf32>
    %285 = arith.mulf %69, %284 : vector<16x16xf32>
    %c5_135 = arith.constant 5 : index
    %c1_136 = arith.constant 1 : index
    %286 = memref.load %arg3[%c5_135, %c1_136] : memref<8x4xf32, #tpu.memory_space<smem>>
    %287 = vector.broadcast %286 : f32 to vector<16x16xf32>
    %288 = arith.mulf %115, %287 : vector<16x16xf32>
    %289 = arith.addf %285, %288 : vector<16x16xf32>
    %c5_137 = arith.constant 5 : index
    %c2_138 = arith.constant 2 : index
    %290 = memref.load %arg3[%c5_137, %c2_138] : memref<8x4xf32, #tpu.memory_space<smem>>
    %291 = vector.broadcast %290 : f32 to vector<16x16xf32>
    %292 = arith.mulf %161, %291 : vector<16x16xf32>
    %293 = arith.addf %289, %292 : vector<16x16xf32>
    %c5_139 = arith.constant 5 : index
    %c3_140 = arith.constant 3 : index
    %294 = memref.load %arg3[%c5_139, %c3_140] : memref<8x4xf32, #tpu.memory_space<smem>>
    %295 = vector.broadcast %294 : f32 to vector<16x16xf32>
    %296 = arith.mulf %207, %295 : vector<16x16xf32>
    %297 = arith.addf %293, %296 : vector<16x16xf32>
    %c6_141 = arith.constant 6 : index
    %c0_142 = arith.constant 0 : index
    %298 = memref.load %arg3[%c6_141, %c0_142] : memref<8x4xf32, #tpu.memory_space<smem>>
    %299 = vector.broadcast %298 : f32 to vector<16x16xf32>
    %300 = arith.mulf %69, %299 : vector<16x16xf32>
    %c6_143 = arith.constant 6 : index
    %c1_144 = arith.constant 1 : index
    %301 = memref.load %arg3[%c6_143, %c1_144] : memref<8x4xf32, #tpu.memory_space<smem>>
    %302 = vector.broadcast %301 : f32 to vector<16x16xf32>
    %303 = arith.mulf %115, %302 : vector<16x16xf32>
    %304 = arith.addf %300, %303 : vector<16x16xf32>
    %c6_145 = arith.constant 6 : index
    %c2_146 = arith.constant 2 : index
    %305 = memref.load %arg3[%c6_145, %c2_146] : memref<8x4xf32, #tpu.memory_space<smem>>
    %306 = vector.broadcast %305 : f32 to vector<16x16xf32>
    %307 = arith.mulf %161, %306 : vector<16x16xf32>
    %308 = arith.addf %304, %307 : vector<16x16xf32>
    %c6_147 = arith.constant 6 : index
    %c3_148 = arith.constant 3 : index
    %309 = memref.load %arg3[%c6_147, %c3_148] : memref<8x4xf32, #tpu.memory_space<smem>>
    %310 = vector.broadcast %309 : f32 to vector<16x16xf32>
    %311 = arith.mulf %207, %310 : vector<16x16xf32>
    %312 = arith.addf %308, %311 : vector<16x16xf32>
    %c7_149 = arith.constant 7 : index
    %c0_150 = arith.constant 0 : index
    %313 = memref.load %arg3[%c7_149, %c0_150] : memref<8x4xf32, #tpu.memory_space<smem>>
    %314 = vector.broadcast %313 : f32 to vector<16x16xf32>
    %315 = arith.mulf %69, %314 : vector<16x16xf32>
    %c7_151 = arith.constant 7 : index
    %c1_152 = arith.constant 1 : index
    %316 = memref.load %arg3[%c7_151, %c1_152] : memref<8x4xf32, #tpu.memory_space<smem>>
    %317 = vector.broadcast %316 : f32 to vector<16x16xf32>
    %318 = arith.mulf %115, %317 : vector<16x16xf32>
    %319 = arith.addf %315, %318 : vector<16x16xf32>
    %c7_153 = arith.constant 7 : index
    %c2_154 = arith.constant 2 : index
    %320 = memref.load %arg3[%c7_153, %c2_154] : memref<8x4xf32, #tpu.memory_space<smem>>
    %321 = vector.broadcast %320 : f32 to vector<16x16xf32>
    %322 = arith.mulf %161, %321 : vector<16x16xf32>
    %323 = arith.addf %319, %322 : vector<16x16xf32>
    %c7_155 = arith.constant 7 : index
    %c3_156 = arith.constant 3 : index
    %324 = memref.load %arg3[%c7_155, %c3_156] : memref<8x4xf32, #tpu.memory_space<smem>>
    %325 = vector.broadcast %324 : f32 to vector<16x16xf32>
    %326 = arith.mulf %207, %325 : vector<16x16xf32>
    %327 = arith.addf %323, %326 : vector<16x16xf32>
    %cst_157 = arith.constant dense<0.000000e+00> : vector<16xf32>
    %328 = vector.multi_reduction <add>, %222, %cst_157 [0] : vector<16x16xf32> to vector<16xf32>
    %329 = arith.addf %2, %328 : vector<16xf32>
    %330 = arith.mulf %222, %222 : vector<16x16xf32>
    %cst_158 = arith.constant dense<0.000000e+00> : vector<16xf32>
    %331 = vector.multi_reduction <add>, %330, %cst_158 [0] : vector<16x16xf32> to vector<16xf32>
    %332 = arith.addf %10, %331 : vector<16xf32>
    %cst_159 = arith.constant dense<0.000000e+00> : vector<16xf32>
    %333 = vector.multi_reduction <add>, %237, %cst_159 [0] : vector<16x16xf32> to vector<16xf32>
    %334 = arith.addf %3, %333 : vector<16xf32>
    %335 = arith.mulf %237, %237 : vector<16x16xf32>
    %cst_160 = arith.constant dense<0.000000e+00> : vector<16xf32>
    %336 = vector.multi_reduction <add>, %335, %cst_160 [0] : vector<16x16xf32> to vector<16xf32>
    %337 = arith.addf %11, %336 : vector<16xf32>
    %cst_161 = arith.constant dense<0.000000e+00> : vector<16xf32>
    %338 = vector.multi_reduction <add>, %252, %cst_161 [0] : vector<16x16xf32> to vector<16xf32>
    %339 = arith.addf %4, %338 : vector<16xf32>
    %340 = arith.mulf %252, %252 : vector<16x16xf32>
    %cst_162 = arith.constant dense<0.000000e+00> : vector<16xf32>
    %341 = vector.multi_reduction <add>, %340, %cst_162 [0] : vector<16x16xf32> to vector<16xf32>
    %342 = arith.addf %12, %341 : vector<16xf32>
    %cst_163 = arith.constant dense<0.000000e+00> : vector<16xf32>
    %343 = vector.multi_reduction <add>, %267, %cst_163 [0] : vector<16x16xf32> to vector<16xf32>
    %344 = arith.addf %5, %343 : vector<16xf32>
    %345 = arith.mulf %267, %267 : vector<16x16xf32>
    %cst_164 = arith.constant dense<0.000000e+00> : vector<16xf32>
    %346 = vector.multi_reduction <add>, %345, %cst_164 [0] : vector<16x16xf32> to vector<16xf32>
    %347 = arith.addf %13, %346 : vector<16xf32>
    %cst_165 = arith.constant dense<0.000000e+00> : vector<16xf32>
    %348 = vector.multi_reduction <add>, %282, %cst_165 [0] : vector<16x16xf32> to vector<16xf32>
    %349 = arith.addf %6, %348 : vector<16xf32>
    %350 = arith.mulf %282, %282 : vector<16x16xf32>
    %cst_166 = arith.constant dense<0.000000e+00> : vector<16xf32>
    %351 = vector.multi_reduction <add>, %350, %cst_166 [0] : vector<16x16xf32> to vector<16xf32>
    %352 = arith.addf %14, %351 : vector<16xf32>
    %cst_167 = arith.constant dense<0.000000e+00> : vector<16xf32>
    %353 = vector.multi_reduction <add>, %297, %cst_167 [0] : vector<16x16xf32> to vector<16xf32>
    %354 = arith.addf %7, %353 : vector<16xf32>
    %355 = arith.mulf %297, %297 : vector<16x16xf32>
    %cst_168 = arith.constant dense<0.000000e+00> : vector<16xf32>
    %356 = vector.multi_reduction <add>, %355, %cst_168 [0] : vector<16x16xf32> to vector<16xf32>
    %357 = arith.addf %15, %356 : vector<16xf32>
    %cst_169 = arith.constant dense<0.000000e+00> : vector<16xf32>
    %358 = vector.multi_reduction <add>, %312, %cst_169 [0] : vector<16x16xf32> to vector<16xf32>
    %359 = arith.addf %8, %358 : vector<16xf32>
    %360 = arith.mulf %312, %312 : vector<16x16xf32>
    %cst_170 = arith.constant dense<0.000000e+00> : vector<16xf32>
    %361 = vector.multi_reduction <add>, %360, %cst_170 [0] : vector<16x16xf32> to vector<16xf32>
    %362 = arith.addf %16, %361 : vector<16xf32>
    %cst_171 = arith.constant dense<0.000000e+00> : vector<16xf32>
    %363 = vector.multi_reduction <add>, %327, %cst_171 [0] : vector<16x16xf32> to vector<16xf32>
    %364 = arith.addf %9, %363 : vector<16xf32>
    %365 = arith.mulf %327, %327 : vector<16x16xf32>
    %cst_172 = arith.constant dense<0.000000e+00> : vector<16xf32>
    %366 = vector.multi_reduction <add>, %365, %cst_172 [0] : vector<16x16xf32> to vector<16xf32>
    %367 = arith.addf %17, %366 : vector<16xf32>
    %c0_173 = arith.constant 0 : index
    %c0_174 = arith.constant 0 : index
    %c0_175 = arith.constant 0 : index
    %c0_176 = arith.constant 0 : index
    %368 = vector.load %arg4[%c0_173, %c0_174, %c0_175, %c0_176] : memref<1x8x2x16xf32, #tpu.memory_space<vmem>>, vector<1x1x1x16xf32>
    %369 = vector.shape_cast %368 : vector<1x1x1x16xf32> to vector<16xf32>
    %370 = vector.shape_cast %329 : vector<16xf32> to vector<1x1x1x16xf32>
    tpu.vector_store %arg4[%c0_173, %c0_174, %c0_175, %c0_176], %370 {strides = array<i32>} : memref<1x8x2x16xf32, #tpu.memory_space<vmem>>, vector<1x1x1x16xf32>,
    %c0_177 = arith.constant 0 : index
    %c0_178 = arith.constant 0 : index
    %c1_179 = arith.constant 1 : index
    %c0_180 = arith.constant 0 : index
    %371 = vector.load %arg4[%c0_177, %c0_178, %c1_179, %c0_180] : memref<1x8x2x16xf32, #tpu.memory_space<vmem>>, vector<1x1x1x16xf32>
    %372 = vector.shape_cast %371 : vector<1x1x1x16xf32> to vector<16xf32>
    %373 = vector.shape_cast %332 : vector<16xf32> to vector<1x1x1x16xf32>
    tpu.vector_store %arg4[%c0_177, %c0_178, %c1_179, %c0_180], %373 {strides = array<i32>} : memref<1x8x2x16xf32, #tpu.memory_space<vmem>>, vector<1x1x1x16xf32>,
    %c0_181 = arith.constant 0 : index
    %c1_182 = arith.constant 1 : index
    %c0_183 = arith.constant 0 : index
    %c0_184 = arith.constant 0 : index
    %374 = vector.load %arg4[%c0_181, %c1_182, %c0_183, %c0_184] : memref<1x8x2x16xf32, #tpu.memory_space<vmem>>, vector<1x1x1x16xf32>
    %375 = vector.shape_cast %374 : vector<1x1x1x16xf32> to vector<16xf32>
    %376 = vector.shape_cast %334 : vector<16xf32> to vector<1x1x1x16xf32>
    tpu.vector_store %arg4[%c0_181, %c1_182, %c0_183, %c0_184], %376 {strides = array<i32>} : memref<1x8x2x16xf32, #tpu.memory_space<vmem>>, vector<1x1x1x16xf32>,
    %c0_185 = arith.constant 0 : index
    %c1_186 = arith.constant 1 : index
    %c1_187 = arith.constant 1 : index
    %c0_188 = arith.constant 0 : index
    %377 = vector.load %arg4[%c0_185, %c1_186, %c1_187, %c0_188] : memref<1x8x2x16xf32, #tpu.memory_space<vmem>>, vector<1x1x1x16xf32>
    %378 = vector.shape_cast %377 : vector<1x1x1x16xf32> to vector<16xf32>
    %379 = vector.shape_cast %337 : vector<16xf32> to vector<1x1x1x16xf32>
    tpu.vector_store %arg4[%c0_185, %c1_186, %c1_187, %c0_188], %379 {strides = array<i32>} : memref<1x8x2x16xf32, #tpu.memory_space<vmem>>, vector<1x1x1x16xf32>,
    %c0_189 = arith.constant 0 : index
    %c2_190 = arith.constant 2 : index
    %c0_191 = arith.constant 0 : index
    %c0_192 = arith.constant 0 : index
    %380 = vector.load %arg4[%c0_189, %c2_190, %c0_191, %c0_192] : memref<1x8x2x16xf32, #tpu.memory_space<vmem>>, vector<1x1x1x16xf32>
    %381 = vector.shape_cast %380 : vector<1x1x1x16xf32> to vector<16xf32>
    %382 = vector.shape_cast %339 : vector<16xf32> to vector<1x1x1x16xf32>
    tpu.vector_store %arg4[%c0_189, %c2_190, %c0_191, %c0_192], %382 {strides = array<i32>} : memref<1x8x2x16xf32, #tpu.memory_space<vmem>>, vector<1x1x1x16xf32>,
    %c0_193 = arith.constant 0 : index
    %c2_194 = arith.constant 2 : index
    %c1_195 = arith.constant 1 : index
    %c0_196 = arith.constant 0 : index
    %383 = vector.load %arg4[%c0_193, %c2_194, %c1_195, %c0_196] : memref<1x8x2x16xf32, #tpu.memory_space<vmem>>, vector<1x1x1x16xf32>
    %384 = vector.shape_cast %383 : vector<1x1x1x16xf32> to vector<16xf32>
    %385 = vector.shape_cast %342 : vector<16xf32> to vector<1x1x1x16xf32>
    tpu.vector_store %arg4[%c0_193, %c2_194, %c1_195, %c0_196], %385 {strides = array<i32>} : memref<1x8x2x16xf32, #tpu.memory_space<vmem>>, vector<1x1x1x16xf32>,
    %c0_197 = arith.constant 0 : index
    %c3_198 = arith.constant 3 : index
    %c0_199 = arith.constant 0 : index
    %c0_200 = arith.constant 0 : index
    %386 = vector.load %arg4[%c0_197, %c3_198, %c0_199, %c0_200] : memref<1x8x2x16xf32, #tpu.memory_space<vmem>>, vector<1x1x1x16xf32>
    %387 = vector.shape_cast %386 : vector<1x1x1x16xf32> to vector<16xf32>
    %388 = vector.shape_cast %344 : vector<16xf32> to vector<1x1x1x16xf32>
    tpu.vector_store %arg4[%c0_197, %c3_198, %c0_199, %c0_200], %388 {strides = array<i32>} : memref<1x8x2x16xf32, #tpu.memory_space<vmem>>, vector<1x1x1x16xf32>,
    %c0_201 = arith.constant 0 : index
    %c3_202 = arith.constant 3 : index
    %c1_203 = arith.constant 1 : index
    %c0_204 = arith.constant 0 : index
    %389 = vector.load %arg4[%c0_201, %c3_202, %c1_203, %c0_204] : memref<1x8x2x16xf32, #tpu.memory_space<vmem>>, vector<1x1x1x16xf32>
    %390 = vector.shape_cast %389 : vector<1x1x1x16xf32> to vector<16xf32>
    %391 = vector.shape_cast %347 : vector<16xf32> to vector<1x1x1x16xf32>
    tpu.vector_store %arg4[%c0_201, %c3_202, %c1_203, %c0_204], %391 {strides = array<i32>} : memref<1x8x2x16xf32, #tpu.memory_space<vmem>>, vector<1x1x1x16xf32>,
    %c0_205 = arith.constant 0 : index
    %c4_206 = arith.constant 4 : index
    %c0_207 = arith.constant 0 : index
    %c0_208 = arith.constant 0 : index
    %392 = vector.load %arg4[%c0_205, %c4_206, %c0_207, %c0_208] : memref<1x8x2x16xf32, #tpu.memory_space<vmem>>, vector<1x1x1x16xf32>
    %393 = vector.shape_cast %392 : vector<1x1x1x16xf32> to vector<16xf32>
    %394 = vector.shape_cast %349 : vector<16xf32> to vector<1x1x1x16xf32>
    tpu.vector_store %arg4[%c0_205, %c4_206, %c0_207, %c0_208], %394 {strides = array<i32>} : memref<1x8x2x16xf32, #tpu.memory_space<vmem>>, vector<1x1x1x16xf32>,
    %c0_209 = arith.constant 0 : index
    %c4_210 = arith.constant 4 : index
    %c1_211 = arith.constant 1 : index
    %c0_212 = arith.constant 0 : index
    %395 = vector.load %arg4[%c0_209, %c4_210, %c1_211, %c0_212] : memref<1x8x2x16xf32, #tpu.memory_space<vmem>>, vector<1x1x1x16xf32>
    %396 = vector.shape_cast %395 : vector<1x1x1x16xf32> to vector<16xf32>
    %397 = vector.shape_cast %352 : vector<16xf32> to vector<1x1x1x16xf32>
    tpu.vector_store %arg4[%c0_209, %c4_210, %c1_211, %c0_212], %397 {strides = array<i32>} : memref<1x8x2x16xf32, #tpu.memory_space<vmem>>, vector<1x1x1x16xf32>,
    %c0_213 = arith.constant 0 : index
    %c5_214 = arith.constant 5 : index
    %c0_215 = arith.constant 0 : index
    %c0_216 = arith.constant 0 : index
    %398 = vector.load %arg4[%c0_213, %c5_214, %c0_215, %c0_216] : memref<1x8x2x16xf32, #tpu.memory_space<vmem>>, vector<1x1x1x16xf32>
    %399 = vector.shape_cast %398 : vector<1x1x1x16xf32> to vector<16xf32>
    %400 = vector.shape_cast %354 : vector<16xf32> to vector<1x1x1x16xf32>
    tpu.vector_store %arg4[%c0_213, %c5_214, %c0_215, %c0_216], %400 {strides = array<i32>} : memref<1x8x2x16xf32, #tpu.memory_space<vmem>>, vector<1x1x1x16xf32>,
    %c0_217 = arith.constant 0 : index
    %c5_218 = arith.constant 5 : index
    %c1_219 = arith.constant 1 : index
    %c0_220 = arith.constant 0 : index
    %401 = vector.load %arg4[%c0_217, %c5_218, %c1_219, %c0_220] : memref<1x8x2x16xf32, #tpu.memory_space<vmem>>, vector<1x1x1x16xf32>
    %402 = vector.shape_cast %401 : vector<1x1x1x16xf32> to vector<16xf32>
    %403 = vector.shape_cast %357 : vector<16xf32> to vector<1x1x1x16xf32>
    tpu.vector_store %arg4[%c0_217, %c5_218, %c1_219, %c0_220], %403 {strides = array<i32>} : memref<1x8x2x16xf32, #tpu.memory_space<vmem>>, vector<1x1x1x16xf32>,
    %c0_221 = arith.constant 0 : index
    %c6_222 = arith.constant 6 : index
    %c0_223 = arith.constant 0 : index
    %c0_224 = arith.constant 0 : index
    %404 = vector.load %arg4[%c0_221, %c6_222, %c0_223, %c0_224] : memref<1x8x2x16xf32, #tpu.memory_space<vmem>>, vector<1x1x1x16xf32>
    %405 = vector.shape_cast %404 : vector<1x1x1x16xf32> to vector<16xf32>
    %406 = vector.shape_cast %359 : vector<16xf32> to vector<1x1x1x16xf32>
    tpu.vector_store %arg4[%c0_221, %c6_222, %c0_223, %c0_224], %406 {strides = array<i32>} : memref<1x8x2x16xf32, #tpu.memory_space<vmem>>, vector<1x1x1x16xf32>,
    %c0_225 = arith.constant 0 : index
    %c6_226 = arith.constant 6 : index
    %c1_227 = arith.constant 1 : index
    %c0_228 = arith.constant 0 : index
    %407 = vector.load %arg4[%c0_225, %c6_226, %c1_227, %c0_228] : memref<1x8x2x16xf32, #tpu.memory_space<vmem>>, vector<1x1x1x16xf32>
    %408 = vector.shape_cast %407 : vector<1x1x1x16xf32> to vector<16xf32>
    %409 = vector.shape_cast %362 : vector<16xf32> to vector<1x1x1x16xf32>
    tpu.vector_store %arg4[%c0_225, %c6_226, %c1_227, %c0_228], %409 {strides = array<i32>} : memref<1x8x2x16xf32, #tpu.memory_space<vmem>>, vector<1x1x1x16xf32>,
    %c0_229 = arith.constant 0 : index
    %c7_230 = arith.constant 7 : index
    %c0_231 = arith.constant 0 : index
    %c0_232 = arith.constant 0 : index
    %410 = vector.load %arg4[%c0_229, %c7_230, %c0_231, %c0_232] : memref<1x8x2x16xf32, #tpu.memory_space<vmem>>, vector<1x1x1x16xf32>
    %411 = vector.shape_cast %410 : vector<1x1x1x16xf32> to vector<16xf32>
    %412 = vector.shape_cast %364 : vector<16xf32> to vector<1x1x1x16xf32>
    tpu.vector_store %arg4[%c0_229, %c7_230, %c0_231, %c0_232], %412 {strides = array<i32>} : memref<1x8x2x16xf32, #tpu.memory_space<vmem>>, vector<1x1x1x16xf32>,
    %c0_233 = arith.constant 0 : index
    %c7_234 = arith.constant 7 : index
    %c1_235 = arith.constant 1 : index
    %c0_236 = arith.constant 0 : index
    %413 = vector.load %arg4[%c0_233, %c7_234, %c1_235, %c0_236] : memref<1x8x2x16xf32, #tpu.memory_space<vmem>>, vector<1x1x1x16xf32>
    %414 = vector.shape_cast %413 : vector<1x1x1x16xf32> to vector<16xf32>
    %415 = vector.shape_cast %367 : vector<16xf32> to vector<1x1x1x16xf32>
    tpu.vector_store %arg4[%c0_233, %c7_234, %c1_235, %c0_236], %415 {strides = array<i32>} : memref<1x8x2x16xf32, #tpu.memory_space<vmem>>, vector<1x1x1x16xf32>,
    return
  }
  func.func @transform_0(%arg0: i32) -> (i32, i32, i32, i32) {
    %c0_i32 = arith.constant 0 : i32
    %c0_i32_0 = arith.constant 0 : i32
    %c0_i32_1 = arith.constant 0 : i32
    %c0_i32_2 = arith.constant 0 : i32
    return %arg0, %c0_i32, %c0_i32_0, %c0_i32_1 : i32, i32, i32, i32
  }
  func.func @transform_1(%arg0: i32) -> (i32, i32) {
    %c0_i32 = arith.constant 0 : i32
    %c0_i32_0 = arith.constant 0 : i32
    %c0_i32_1 = arith.constant 0 : i32
    return %c0_i32, %c0_i32_0 : i32, i32
  }
  func.func @transform_2(%arg0: i32) -> (i32, i32) {
    %c0_i32 = arith.constant 0 : i32
    %c0_i32_0 = arith.constant 0 : i32
    %c0_i32_1 = arith.constant 0 : i32
    return %c0_i32, %c0_i32_0 : i32, i32
  }
  func.func @transform_3(%arg0: i32) -> (i32, i32, i32, i32) {
    %c0_i32 = arith.constant 0 : i32
    %c0_i32_0 = arith.constant 0 : i32
    %c0_i32_1 = arith.constant 0 : i32
    %c0_i32_2 = arith.constant 0 : i32
    return %arg0, %c0_i32, %c0_i32_0, %c0_i32_1 : i32, i32, i32, i32
  }
}

</mosaic_0001>

<llo_original>
// kernel: tpu_custom_call.1
$region0: #{tpu_custom_call.1}
  #allocation0 [shape = 'u32[]', space=smem, size = 0x4, offset = 0x4, fixed_abs, tag = 'smem constant byte address 0x4 - core index']
  #allocation1 [shape = 'u32[144,128]{1,0:T(1,128)}', space=vmem, size = 0x12000, scoped, tag = 'internal scratch']
  #allocation2 [shape = 'f32[4,20,20]{2,1,0:T(8,128)}', space=vmem, size = 0xc000, scoped, tag = 'scratch operand']
  %s0 = inlined_call_operand.hbm [shape: f32[2,4,16,16], index: 0, kind: input, shape index: {}]
  %s1 = inlined_call_operand.vmem [shape: f32[4,9], index: 1, kind: input, shape index: {}]
  %s2 = inlined_call_operand.vmem [shape: f32[8,4], index: 2, kind: input, shape index: {}]
  %s3 = inlined_call_operand.hbm [shape: f32[2,8,2,16], index: 3, kind: output, shape index: {}]
  %s4 = sld [smem:[#allocation0]]
  $region57: #{tpu_custom_call.1} parent=0
    _
  %s6 = ssub.s32 1, %s4
  %s7 = scalar_select 0, %s6, %s4
  $region1: #{tpu_custom_call.1} parent=0
    #allocation3 [shape = 'u8[65536]{0}', space=vmem, size = 0x10000, scoped, tag = 'input window, operand 0']
    #allocation4 [shape = 's32[2]{0}', space=sflag, size = 0x8, scoped, tag = 'scoped memory for tpu_custom_call.1']
    #allocation5 [shape = 's32[2]{0}', space=sflag, size = 0x8, scoped, tag = 'scoped memory for tpu_custom_call.1']
    #allocation6 [shape = 's32[2]{0}', space=sflag, size = 0x8, scoped, tag = 'scoped memory for tpu_custom_call.1']
    #allocation7 [shape = 'u8[2048]{0}', space=smem, size = 0x800, scoped, tag = 'input window, operand 1, single buffered']
    #allocation8 [shape = 'u8[4096]{0}', space=smem, size = 0x1000, scoped, tag = 'input window, operand 2, single buffered']
    #allocation9 [shape = 's32[1]{0}', space=sflag, size = 0x4, scoped, tag = 'scoped memory for tpu_custom_call.1']
    #allocation10 [shape = 'u8[16384]{0}', space=vmem, size = 0x4000, scoped, tag = 'output window, operand 0']
    %8 = vsyncpa [#allocation4], 0
    %s9 = scalar_lea.sflag [#allocation4], 1
    %10 = vsyncpa %s9, 0
    %11 = vsyncpa [#allocation6], 0
    %12 = vsyncpa [#allocation9], 0
    %13 = vsyncpa [#allocation5], 0
    %s14 = scalar_lea.sflag [#allocation5], 1
    %15 = vsyncpa %s14, 0
    loop: start=0, step=1, limit=4
    $region2: #{tpu_custom_call.1} parent=1 // loop_pre_header
      _
    $region3: #{tpu_custom_call.1} parent=1 // loop_header
      %s17 = sphi 0, %s21
      %p18 = scmp.ge.s32.totalorder %s17, 4
      %s27 = sphi 0, %s29
      %s30 = sphi 0, %s27
      %s31 = sphi 0, %s30
      %s47 = sphi 0, %s31
      %s51 = sphi 0, %s51
      %s53 = sphi 0, %s51
      %s54 = sphi 0, %s53
      %s68 = sphi 0, %s54
      %s72 = sphi 0, %s72
      %s74 = sphi 0, %s72
      %s75 = sphi 0, %s74
      %s89 = sphi 0, %s75
      %s95 = sphi 0, %s97
      %s98 = sphi 0, %s95
      %s99 = sphi 0, %s98
      %s115 = sphi 0, %s99
    $region4: #{tpu_custom_call.1} parent=1 // loop_header_branch
      %20 = sbr.rel (%p18) target = $region8
    $region5: #{tpu_custom_call.1} parent=1 // loop_body
      %s22 = ssub.s32 %s17, 1
      %s23 = ssub.s32 %s17, 2
      %s24 = sadd.s32 %s17, 1
      %s25 = ssub.s32 %s17, %s24
      %p26 = scmp.eq.s32.totalorder %s25, 0
      %s28 = sadd.s32 %s27, 1
      %s29 = scalar_select %p26, %s27, %s28
      %p32 = pneg %p26
      %p33 = scmp.eq.s32.totalorder %s17, 1
      %p34 = por %p32, %p33
      %p35 = scmp.ne.s32.totalorder %s27, %s30
      %p36 = scmp.eq.s32.totalorder %s17, 0
      %p37 = por %p35, %p36
      %p38 = scmp.ne.s32.totalorder %s27, %s30
      %p39 = scmp.eq.s32.totalorder %s22, 1
      %p40 = por %p38, %p39
      %p41 = scmp.ne.s32.totalorder %s30, %s31
      %p42 = scmp.eq.s32.totalorder %s22, 0
      %p43 = por %p41, %p42
      %p44 = scmp.ne.s32.totalorder %s30, %s31
      %p45 = scmp.eq.s32.totalorder %s23, 1
      %p46 = por %p44, %p45
      %p48 = scmp.ne.s32.totalorder %s31, %s47
      %p49 = scmp.eq.s32.totalorder %s23, 0
      %p50 = por %p48, %p49
      %s52 = sadd.s32 %s51, 1
      %p55 = scmp.eq.s32.totalorder %s17, 1
      %p56 = scmp.ne.s32.totalorder %s51, %s53
      %p57 = scmp.eq.s32.totalorder %s17, 0
      %p58 = por %p56, %p57
      %p59 = scmp.ne.s32.totalorder %s51, %s53
      %p60 = scmp.eq.s32.totalorder %s22, 1
      %p61 = por %p59, %p60
      %p62 = scmp.ne.s32.totalorder %s53, %s54
      %p63 = scmp.eq.s32.totalorder %s22, 0
      %p64 = por %p62, %p63
      %p65 = scmp.ne.s32.totalorder %s53, %s54
      %p66 = scmp.eq.s32.totalorder %s23, 1
      %p67 = por %p65, %p66
      %p69 = scmp.ne.s32.totalorder %s54, %s68
      %p70 = scmp.eq.s32.totalorder %s23, 0
      %p71 = por %p69, %p70
      %s73 = sadd.s32 %s72, 1
      %p76 = scmp.eq.s32.totalorder %s17, 1
      %p77 = scmp.ne.s32.totalorder %s72, %s74
      %p78 = scmp.eq.s32.totalorder %s17, 0
      %p79 = por %p77, %p78
      %p80 = scmp.ne.s32.totalorder %s72, %s74
      %p81 = scmp.eq.s32.totalorder %s22, 1
      %p82 = por %p80, %p81
      %p83 = scmp.ne.s32.totalorder %s74, %s75
      %p84 = scmp.eq.s32.totalorder %s22, 0
      %p85 = por %p83, %p84
      %p86 = scmp.ne.s32.totalorder %s74, %s75
      %p87 = scmp.eq.s32.totalorder %s23, 1
      %p88 = por %p86, %p87
      %p90 = scmp.ne.s32.totalorder %s75, %s89
      %p91 = scmp.eq.s32.totalorder %s23, 0
      %p92 = por %p90, %p91
      %s93 = ssub.s32 %s17, %s24
      %p94 = scmp.eq.s32.totalorder %s93, 0
      %s96 = sadd.s32 %s95, 1
      %s97 = scalar_select %p94, %s95, %s96
      %p100 = pneg %p94
      %p101 = scmp.eq.s32.totalorder %s17, 1
      %p102 = por %p100, %p101
      %p103 = scmp.ne.s32.totalorder %s95, %s98
      %p104 = scmp.eq.s32.totalorder %s17, 0
      %p105 = por %p103, %p104
      %p106 = scmp.ne.s32.totalorder %s95, %s98
      %p107 = scmp.eq.s32.totalorder %s22, 1
      %p108 = por %p106, %p107
      %p109 = scmp.ne.s32.totalorder %s98, %s99
      %p110 = scmp.eq.s32.totalorder %s22, 0
      %p111 = por %p109, %p110
      %p112 = scmp.ne.s32.totalorder %s98, %s99
      %p113 = scmp.eq.s32.totalorder %s23, 1
      %p114 = por %p112, %p113
      %p116 = scmp.ne.s32.totalorder %s99, %s115
      %p117 = scmp.eq.s32.totalorder %s23, 0
      %p118 = por %p116, %p117
      %p119 = scmp.le.s32.totalorder 1, %s17
      %p120 = scmp.lt.s32.totalorder %s17, 3
      %p121 = pnand %p119, %p120
      %p122 = pneg %p121
      // Predicated region
      $region9: #{tpu_custom_call.1} parent=5 // pred_check
        _
      $region10: #{tpu_custom_call.1} parent=5 // pred_check_branch
        %124 = sbr.rel (%p121) target = $region12
      $region11: #{tpu_custom_call.1} parent=5 // pred_region
        %s125 = ssub.s32 %s17, 1
        // Predicated region
        $region13: #{tpu_custom_call.1} parent=11 // pred_check
          %p126 = pneg %p64
        $region14: #{tpu_custom_call.1} parent=11 // pred_check_branch
          %128 = sbr.rel (%p126) target = $region16
        $region15: #{tpu_custom_call.1} parent=11 // pred_region
          %s130 = ssub.s32 64, 64
          %131 = vsyncadd [#allocation6], %s130
          %s133 = sshll.u32 %s1, 4
          %s134 = int_to_ptr.vmem [resolvable:$true] %s133
          %136 = dma.vmem_to_smem %s134, 64, [#allocation7], [#allocation6]
        $region16: #{tpu_custom_call.1} parent=11 // pred_fallthru
          _
        // Predicated region
        $region17: #{tpu_custom_call.1} parent=11 // pred_check
          %p137 = pneg %p85
        $region18: #{tpu_custom_call.1} parent=11 // pred_check_branch
          %139 = sbr.rel (%p137) target = $region20
        $region19: #{tpu_custom_call.1} parent=11 // pred_region
          %s141 = ssub.s32 128, 128
          %142 = vsyncadd [#allocation9], %s141
          %s144 = sshll.u32 %s2, 4
          %s145 = int_to_ptr.vmem [resolvable:$true] %s144
          %147 = dma.vmem_to_smem %s145, 128, [#allocation8], [#allocation9]
        $region20: #{tpu_custom_call.1} parent=11 // pred_fallthru
          _
      $region12: #{tpu_custom_call.1} parent=5 // pred_fallthru
        _
      %p148 = scmp.lt.s32.totalorder %s17, 2
      // Predicated region
      $region21: #{tpu_custom_call.1} parent=5 // pred_check
        %p149 = pneg %p148
      $region22: #{tpu_custom_call.1} parent=5 // pred_check_branch
        %151 = sbr.rel (%p149) target = $region24
      $region23: #{tpu_custom_call.1} parent=5 // pred_region
        // Predicated region
        $region25: #{tpu_custom_call.1} parent=23 // pred_check
          %p152 = pneg %p37
        $region26: #{tpu_custom_call.1} parent=23 // pred_check_branch
          %154 = sbr.rel (%p152) target = $region28
        $region27: #{tpu_custom_call.1} parent=23 // pred_region
          %s155 = sand.u32 %s27, 1
          %s156 = scalar_lea.sflag [#allocation4], %s155
          %s157 = sand.u32 %s27, 1
          %s158 = smul.addr %s157, 64
          %s159 = scalar_lea.vmem [#allocation3], %s158
          %s161 = ssub.s32 1024, 1024
          %162 = vsyncadd %s156, %s161
          %s163 = smul.addr %s17, 8
          %s164 = smul.addr %s163, 128
          %s165 = scalar_lea.hbm %s0, %s164
          %s166 = sshll.u32 %s159, 4
          %s167 = int_to_ptr.vmem [resolvable:$true] %s166
          %172 = dma.hbm_to_vmem [thread:$0]  %s165, 1024, %s167, %s156, 128, 128, 8
        $region28: #{tpu_custom_call.1} parent=23 // pred_fallthru
          _
      $region24: #{tpu_custom_call.1} parent=5 // pred_fallthru
        _
      %p173 = scmp.le.s32.totalorder 1, %s17
      %p174 = scmp.lt.s32.totalorder %s17, 3
      %p175 = pnand %p173, %p174
      %p176 = pneg %p175
      // Predicated region
      $region29: #{tpu_custom_call.1} parent=5 // pred_check
        _
      $region30: #{tpu_custom_call.1} parent=5 // pred_check_branch
        %178 = sbr.rel (%p175) target = $region32
      $region31: #{tpu_custom_call.1} parent=5 // pred_region
        %s179 = ssub.s32 %s17, 1
        %s180 = sand.u32 %s30, 1
        %s181 = scalar_lea.sflag [#allocation4], %s180
        %s182 = sand.u32 %s30, 1
        %s183 = smul.addr %s182, 64
        %s184 = scalar_lea.vmem [#allocation3], %s183
        // Predicated region
        $region33: #{tpu_custom_call.1} parent=31 // pred_check
          %p185 = pneg %p43
        $region34: #{tpu_custom_call.1} parent=31 // pred_check_branch
          %187 = sbr.rel (%p185) target = $region36
        $region35: #{tpu_custom_call.1} parent=31 // pred_region
          %188 = dma.done %s181, 1024
        $region36: #{tpu_custom_call.1} parent=31 // pred_fallthru
          _
        // Predicated region
        $region37: #{tpu_custom_call.1} parent=31 // pred_check
          %p189 = pneg %p64
        $region38: #{tpu_custom_call.1} parent=31 // pred_check_branch
          %191 = sbr.rel (%p189) target = $region40
        $region39: #{tpu_custom_call.1} parent=31 // pred_region
          %192 = dma.done [#allocation6], 64
        $region40: #{tpu_custom_call.1} parent=31 // pred_fallthru
          _
        // Predicated region
        $region41: #{tpu_custom_call.1} parent=31 // pred_check
          %p193 = pneg %p85
        $region42: #{tpu_custom_call.1} parent=31 // pred_check_branch
          %195 = sbr.rel (%p193) target = $region44
        $region43: #{tpu_custom_call.1} parent=31 // pred_region
          %196 = dma.done [#allocation9], 128
        $region44: #{tpu_custom_call.1} parent=31 // pred_fallthru
          _
        %197 = sfence
        %s198 = sand.u32 %s30, 1
        %s199 = scalar_lea.sflag [#allocation4], %s198
        %s200 = sand.u32 %s30, 1
        %s201 = smul.addr %s200, 64
        %s202 = scalar_lea.vmem [#allocation3], %s201
        %p203 = pneg %p43
        %p204 = pneg %p40
        %p205 = pneg %p64
        %p206 = pneg %p61
        %p207 = pneg %p85
        %p208 = pneg %p82
        %p209 = pneg %p111
        %p210 = pneg %p108
        %s211 = sand.u32 %s98, 1
        %s212 = scalar_lea.sflag [#allocation5], %s211
        %s213 = sand.u32 %s98, 1
        %s214 = smul.addr %s213, 16
        %s215 = scalar_lea.vmem [#allocation10], %s214
        %vm216 = vcmask 162816
        %217 = vst.msk [vmem:[#allocation2] sm:$0xff] %vm216, 0.0
        %218 = vst.msk [vmem:[#allocation2 + $0x8] sm:$0xff] %vm216, 0.0
        %vm219 = vcmask 158720
        %220 = vst.msk [vmem:[#allocation2 + $0x10] sm:$0xf] %vm219, 0.0
        %221 = vst.msk [vmem:[#allocation2 + $0x18] sm:$0xff] %vm216, 0.0
        %222 = vst.msk [vmem:[#allocation2 + $0x20] sm:$0xff] %vm216, 0.0
        %223 = vst.msk [vmem:[#allocation2 + $0x28] sm:$0xf] %vm219, 0.0
        %224 = vst.msk [vmem:[#allocation2 + $0x30] sm:$0xff] %vm216, 0.0
        %225 = vst.msk [vmem:[#allocation2 + $0x38] sm:$0xff] %vm216, 0.0
        %226 = vst.msk [vmem:[#allocation2 + $0x40] sm:$0xf] %vm219, 0.0
        %227 = vst.msk [vmem:[#allocation2 + $0x48] sm:$0xff] %vm216, 0.0
        %228 = vst.msk [vmem:[#allocation2 + $0x50] sm:$0xff] %vm216, 0.0
        %229 = vst.msk [vmem:[#allocation2 + $0x58] sm:$0xf] %vm219, 0.0
        %v230 = vld [vmem:[%s184] sm:$0xff]
        %v231 = vld [vmem:[%s184 + $0x8] sm:$0xff]
        %v232 = vld [vmem:[%s184 + $0x10] sm:$0xff]
        %v233 = vld [vmem:[%s184 + $0x18] sm:$0xff]
        %v234 = vld [vmem:[%s184 + $0x20] sm:$0xff]
        %v235 = vld [vmem:[%s184 + $0x28] sm:$0xff]
        %v236 = vld [vmem:[%s184 + $0x30] sm:$0xff]
        %v237 = vld [vmem:[%s184 + $0x38] sm:$0xff]
        %v238 = vmax.f32 %v230, 0.0
        %v239 = vmax.f32 %v231, 0.0
        %v240 = vmax.f32 %v232, 0.0
        %v241 = vmax.f32 %v233, 0.0
        %v242 = vmax.f32 %v234, 0.0
        %v243 = vmax.f32 %v235, 0.0
        %v244 = vmax.f32 %v236, 0.0
        %v245 = vmax.f32 %v237, 0.0
        %254 = vrot.lane.b32.xlu0 %v238, 2
        %v255 = vpop.permute.xlu0 %254
        %256 = vrot.lane.b32.xlu0 %v239, 2
        %v257 = vpop.permute.xlu0 %256
        %258 = vrot.lane.b32.xlu0 %v240, 2
        %v259 = vpop.permute.xlu0 %258
        %260 = vrot.lane.b32.xlu0 %v241, 2
        %v261 = vpop.permute.xlu0 %260
        %262 = vrot.lane.b32.xlu0 %v242, 2
        %v263 = vpop.permute.xlu0 %262
        %264 = vrot.lane.b32.xlu0 %v243, 2
        %v265 = vpop.permute.xlu0 %264
        %266 = vrot.lane.b32.xlu0 %v244, 2
        %v267 = vpop.permute.xlu0 %266
        %268 = vrot.lane.b32.xlu0 %v245, 2
        %v269 = vpop.permute.xlu0 %268
        %vm278 = vcmask 146448
        %279 = vst.msk [vmem:[#allocation2 + $0x2] sm:$0xff] %vm278, %v255
        %280 = vst.msk [vmem:[#allocation2 + $0xa] sm:$0xff] %vm278, %v257
        %281 = vst.msk [vmem:[#allocation2 + $0x1a] sm:$0xff] %vm278, %v259
        %282 = vst.msk [vmem:[#allocation2 + $0x22] sm:$0xff] %vm278, %v261
        %283 = vst.msk [vmem:[#allocation2 + $0x32] sm:$0xff] %vm278, %v263
        %284 = vst.msk [vmem:[#allocation2 + $0x3a] sm:$0xff] %vm278, %v265
        %285 = vst.msk [vmem:[#allocation2 + $0x4a] sm:$0xff] %vm278, %v267
        %286 = vst.msk [vmem:[#allocation2 + $0x52] sm:$0xff] %vm278, %v269
        %v287 = vld [vmem:[#allocation2] sm:$0xff]
        %v288 = vld [vmem:[#allocation2 + $0x8] sm:$0xff]
        %v289 = vld [vmem:[#allocation2 + $0x10] sm:$0xf]
        %v290 = vld [vmem:[#allocation2 + $0x18] sm:$0xff]
        %v291 = vld [vmem:[#allocation2 + $0x20] sm:$0xff]
        %v292 = vld [vmem:[#allocation2 + $0x28] sm:$0xf]
        %v293 = vld [vmem:[#allocation2 + $0x30] sm:$0xff]
        %v294 = vld [vmem:[#allocation2 + $0x38] sm:$0xff]
        %v295 = vld [vmem:[#allocation2 + $0x40] sm:$0xf]
        %v296 = vld [vmem:[#allocation2 + $0x48] sm:$0xff]
        %v297 = vld [vmem:[#allocation2 + $0x50] sm:$0xff]
        %v298 = vld [vmem:[#allocation2 + $0x58] sm:$0xf]
        %s299 = sld [smem:[#allocation7]]
        %v300 = vstv %s299
        %v301 = vmul.f32 %v287, %v300
        %v302 = vmul.f32 %v288, %v300
        %s303 = sld [smem:[#allocation7 + $0x1]]
        %v304 = vstv %s303
        %v305 = vmul.f32 %v287, %v304
        %v306 = vmul.f32 %v288, %v304
        %309 = vrot.lane.b32.xlu0 %v305, 126
        %v310 = vpop.permute.xlu0 %309
        %311 = vrot.lane.b32.xlu0 %v306, 126
        %v312 = vpop.permute.xlu0 %311
        %v315 = vadd.f32 %v301, %v310
        %v316 = vadd.f32 %v302, %v312
        %s317 = sld [smem:[#allocation7 + $0x2]]
        %v318 = vstv %s317
        %v319 = vmul.f32 %v287, %v318
        %v320 = vmul.f32 %v288, %v318
        %323 = vrot.lane.b32.xlu0 %v319, 124
        %v324 = vpop.permute.xlu0 %323
        %325 = vrot.lane.b32.xlu0 %v320, 124
        %v326 = vpop.permute.xlu0 %325
        %v329 = vadd.f32 %v315, %v324
        %v330 = vadd.f32 %v316, %v326
        %s331 = sld [smem:[#allocation7 + $0x3]]
        %v332 = vstv %s331
        %v333 = vmul.f32 %v287, %v332
        %v334 = vmul.f32 %v288, %v332
        %v335 = vmul.f32 %v289, %v332
        %vm339 = vcmask 1045504
        %v340 = vrot.slane %v333, 2
        %v341 = vrot.slane %v334, 2
        %v342 = vsel %vm339, %v340, %v341
        %v343 = vrot.slane %v335, 2
        %v344 = vsel %vm339, %v341, %v343
        %v347 = vadd.f32 %v329, %v342
        %v348 = vadd.f32 %v330, %v344
        %s349 = sld [smem:[#allocation7 + $0x4]]
        %v350 = vstv %s349
        %v351 = vmul.f32 %v287, %v350
        %v352 = vmul.f32 %v288, %v350
        %v353 = vmul.f32 %v289, %v350
        %v357 = vrot.slane %v351, 2
        %v358 = vrot.slane %v352, 2
        %v359 = vsel %vm339, %v357, %v358
        %v360 = vrot.slane %v353, 2
        %v361 = vsel %vm339, %v358, %v360
        %362 = vrot.lane.b32.xlu0 %v359, 126
        %v363 = vpop.permute.xlu0 %362
        %364 = vrot.lane.b32.xlu0 %v361, 126
        %v365 = vpop.permute.xlu0 %364
        %v368 = vadd.f32 %v347, %v363
        %v369 = vadd.f32 %v348, %v365
        %s370 = sld [smem:[#allocation7 + $0x5]]
        %v371 = vstv %s370
        %v372 = vmul.f32 %v287, %v371
        %v373 = vmul.f32 %v288, %v371
        %v374 = vmul.f32 %v289, %v371
        %v378 = vrot.slane %v372, 2
        %v379 = vrot.slane %v373, 2
        %v380 = vsel %vm339, %v378, %v379
        %v381 = vrot.slane %v374, 2
        %v382 = vsel %vm339, %v379, %v381
        %383 = vrot.lane.b32.xlu0 %v380, 124
        %v384 = vpop.permute.xlu0 %383
        %385 = vrot.lane.b32.xlu0 %v382, 124
        %v386 = vpop.permute.xlu0 %385
        %v389 = vadd.f32 %v368, %v384
        %v390 = vadd.f32 %v369, %v386
        %s391 = sld [smem:[#allocation7 + $0x6]]
        %v392 = vstv %s391
        %v393 = vmul.f32 %v287, %v392
        %v394 = vmul.f32 %v288, %v392
        %v395 = vmul.f32 %v289, %v392
        %vm399 = vcmask 1043456
        %v400 = vrot.slane %v393, 4
        %v401 = vrot.slane %v394, 4
        %v402 = vsel %vm399, %v400, %v401
        %v403 = vrot.slane %v395, 4
        %v404 = vsel %vm399, %v401, %v403
        %v407 = vadd.f32 %v389, %v402
        %v408 = vadd.f32 %v390, %v404
        %s409 = sld [smem:[#allocation7 + $0x7]]
        %v410 = vstv %s409
        %v411 = vmul.f32 %v287, %v410
        %v412 = vmul.f32 %v288, %v410
        %v413 = vmul.f32 %v289, %v410
        %v417 = vrot.slane %v411, 4
        %v418 = vrot.slane %v412, 4
        %v419 = vsel %vm399, %v417, %v418
        %v420 = vrot.slane %v413, 4
        %v421 = vsel %vm399, %v418, %v420
        %422 = vrot.lane.b32.xlu0 %v419, 126
        %v423 = vpop.permute.xlu0 %422
        %424 = vrot.lane.b32.xlu0 %v421, 126
        %v425 = vpop.permute.xlu0 %424
        %v428 = vadd.f32 %v407, %v423
        %v429 = vadd.f32 %v408, %v425
        %s430 = sld [smem:[#allocation7 + $0x8]]
        %v431 = vstv %s430
        %v432 = vmul.f32 %v287, %v431
        %v433 = vmul.f32 %v288, %v431
        %v434 = vmul.f32 %v289, %v431
        %v438 = vrot.slane %v432, 4
        %v439 = vrot.slane %v433, 4
        %v440 = vsel %vm399, %v438, %v439
        %v441 = vrot.slane %v434, 4
        %v442 = vsel %vm399, %v439, %v441
        %443 = vrot.lane.b32.xlu0 %v440, 124
        %v444 = vpop.permute.xlu0 %443
        %445 = vrot.lane.b32.xlu0 %v442, 124
        %v446 = vpop.permute.xlu0 %445
        %v449 = vadd.f32 %v428, %v444
        %v450 = vadd.f32 %v429, %v446
        %s451 = sld [smem:[#allocation7 + $0x80]]
        %v452 = vstv %s451
        %v453 = vmul.f32 %v290, %v452
        %v454 = vmul.f32 %v291, %v452
        %s455 = sld [smem:[#allocation7 + $0x81]]
        %v456 = vstv %s455
        %v457 = vmul.f32 %v290, %v456
        %v458 = vmul.f32 %v291, %v456
        %461 = vrot.lane.b32.xlu0 %v457, 126
        %v462 = vpop.permute.xlu0 %461
        %463 = vrot.lane.b32.xlu0 %v458, 126
        %v464 = vpop.permute.xlu0 %463
        %v467 = vadd.f32 %v453, %v462
        %v468 = vadd.f32 %v454, %v464
        %s469 = sld [smem:[#allocation7 + $0x82]]
        %v470 = vstv %s469
        %v471 = vmul.f32 %v290, %v470
        %v472 = vmul.f32 %v291, %v470
        %475 = vrot.lane.b32.xlu0 %v471, 124
        %v476 = vpop.permute.xlu0 %475
        %477 = vrot.lane.b32.xlu0 %v472, 124
        %v478 = vpop.permute.xlu0 %477
        %v481 = vadd.f32 %v467, %v476
        %v482 = vadd.f32 %v468, %v478
        %s483 = sld [smem:[#allocation7 + $0x83]]
        %v484 = vstv %s483
        %v485 = vmul.f32 %v290, %v484
        %v486 = vmul.f32 %v291, %v484
        %v487 = vmul.f32 %v292, %v484
        %v491 = vrot.slane %v485, 2
        %v492 = vrot.slane %v486, 2
        %v493 = vsel %vm339, %v491, %v492
        %v494 = vrot.slane %v487, 2
        %v495 = vsel %vm339, %v492, %v494
        %v498 = vadd.f32 %v481, %v493
        %v499 = vadd.f32 %v482, %v495
        %s500 = sld [smem:[#allocation7 + $0x84]]
        %v501 = vstv %s500
        %v502 = vmul.f32 %v290, %v501
        %v503 = vmul.f32 %v291, %v501
        %v504 = vmul.f32 %v292, %v501
        %v508 = vrot.slane %v502, 2
        %v509 = vrot.slane %v503, 2
        %v510 = vsel %vm339, %v508, %v509
        %v511 = vrot.slane %v504, 2
        %v512 = vsel %vm339, %v509, %v511
        %513 = vrot.lane.b32.xlu0 %v510, 126
        %v514 = vpop.permute.xlu0 %513
        %515 = vrot.lane.b32.xlu0 %v512, 126
        %v516 = vpop.permute.xlu0 %515
        %v519 = vadd.f32 %v498, %v514
        %v520 = vadd.f32 %v499, %v516
        %s521 = sld [smem:[#allocation7 + $0x85]]
        %v522 = vstv %s521
        %v523 = vmul.f32 %v290, %v522
        %v524 = vmul.f32 %v291, %v522
        %v525 = vmul.f32 %v292, %v522
        %v529 = vrot.slane %v523, 2
        %v530 = vrot.slane %v524, 2
        %v531 = vsel %vm339, %v529, %v530
        %v532 = vrot.slane %v525, 2
        %v533 = vsel %vm339, %v530, %v532
        %534 = vrot.lane.b32.xlu0 %v531, 124
        %v535 = vpop.permute.xlu0 %534
        %536 = vrot.lane.b32.xlu0 %v533, 124
        %v537 = vpop.permute.xlu0 %536
        %v540 = vadd.f32 %v519, %v535
        %v541 = vadd.f32 %v520, %v537
        %s542 = sld [smem:[#allocation7 + $0x86]]
        %v543 = vstv %s542
        %v544 = vmul.f32 %v290, %v543
        %v545 = vmul.f32 %v291, %v543
        %v546 = vmul.f32 %v292, %v543
        %v550 = vrot.slane %v544, 4
        %v551 = vrot.slane %v545, 4
        %v552 = vsel %vm399, %v550, %v551
        %v553 = vrot.slane %v546, 4
        %v554 = vsel %vm399, %v551, %v553
        %v557 = vadd.f32 %v540, %v552
        %v558 = vadd.f32 %v541, %v554
        %s559 = sld [smem:[#allocation7 + $0x87]]
        %v560 = vstv %s559
        %v561 = vmul.f32 %v290, %v560
        %v562 = vmul.f32 %v291, %v560
        %v563 = vmul.f32 %v292, %v560
        %v567 = vrot.slane %v561, 4
        %v568 = vrot.slane %v562, 4
        %v569 = vsel %vm399, %v567, %v568
        %v570 = vrot.slane %v563, 4
        %v571 = vsel %vm399, %v568, %v570
        %572 = vrot.lane.b32.xlu0 %v569, 126
        %v573 = vpop.permute.xlu0 %572
        %574 = vrot.lane.b32.xlu0 %v571, 126
        %v575 = vpop.permute.xlu0 %574
        %v578 = vadd.f32 %v557, %v573
        %v579 = vadd.f32 %v558, %v575
        %s580 = sld [smem:[#allocation7 + $0x88]]
        %v581 = vstv %s580
        %v582 = vmul.f32 %v290, %v581
        %v583 = vmul.f32 %v291, %v581
        %v584 = vmul.f32 %v292, %v581
        %v588 = vrot.slane %v582, 4
        %v589 = vrot.slane %v583, 4
        %v590 = vsel %vm399, %v588, %v589
        %v591 = vrot.slane %v584, 4
        %v592 = vsel %vm399, %v589, %v591
        %593 = vrot.lane.b32.xlu0 %v590, 124
        %v594 = vpop.permute.xlu0 %593
        %595 = vrot.lane.b32.xlu0 %v592, 124
        %v596 = vpop.permute.xlu0 %595
        %v599 = vadd.f32 %v578, %v594
        %v600 = vadd.f32 %v579, %v596
        %s601 = sld [smem:[#allocation7 + $0x100]]
        %v602 = vstv %s601
        %v603 = vmul.f32 %v293, %v602
        %v604 = vmul.f32 %v294, %v602
        %s605 = sld [smem:[#allocation7 + $0x101]]
        %v606 = vstv %s605
        %v607 = vmul.f32 %v293, %v606
        %v608 = vmul.f32 %v294, %v606
        %611 = vrot.lane.b32.xlu0 %v607, 126
        %v612 = vpop.permute.xlu0 %611
        %613 = vrot.lane.b32.xlu0 %v608, 126
        %v614 = vpop.permute.xlu0 %613
        %v617 = vadd.f32 %v603, %v612
        %v618 = vadd.f32 %v604, %v614
        %s619 = sld [smem:[#allocation7 + $0x102]]
        %v620 = vstv %s619
        %v621 = vmul.f32 %v293, %v620
        %v622 = vmul.f32 %v294, %v620
        %625 = vrot.lane.b32.xlu0 %v621, 124
        %v626 = vpop.permute.xlu0 %625
        %627 = vrot.lane.b32.xlu0 %v622, 124
        %v628 = vpop.permute.xlu0 %627
        %v631 = vadd.f32 %v617, %v626
        %v632 = vadd.f32 %v618, %v628
        %s633 = sld [smem:[#allocation7 + $0x103]]
        %v634 = vstv %s633
        %v635 = vmul.f32 %v293, %v634
        %v636 = vmul.f32 %v294, %v634
        %v637 = vmul.f32 %v295, %v634
        %v641 = vrot.slane %v635, 2
        %v642 = vrot.slane %v636, 2
        %v643 = vsel %vm339, %v641, %v642
        %v644 = vrot.slane %v637, 2
        %v645 = vsel %vm339, %v642, %v644
        %v648 = vadd.f32 %v631, %v643
        %v649 = vadd.f32 %v632, %v645
        %s650 = sld [smem:[#allocation7 + $0x104]]
        %v651 = vstv %s650
        %v652 = vmul.f32 %v293, %v651
        %v653 = vmul.f32 %v294, %v651
        %v654 = vmul.f32 %v295, %v651
        %v658 = vrot.slane %v652, 2
        %v659 = vrot.slane %v653, 2
        %v660 = vsel %vm339, %v658, %v659
        %v661 = vrot.slane %v654, 2
        %v662 = vsel %vm339, %v659, %v661
        %663 = vrot.lane.b32.xlu0 %v660, 126
        %v664 = vpop.permute.xlu0 %663
        %665 = vrot.lane.b32.xlu0 %v662, 126
        %v666 = vpop.permute.xlu0 %665
        %v669 = vadd.f32 %v648, %v664
        %v670 = vadd.f32 %v649, %v666
        %s671 = sld [smem:[#allocation7 + $0x105]]
        %v672 = vstv %s671
        %v673 = vmul.f32 %v293, %v672
        %v674 = vmul.f32 %v294, %v672
        %v675 = vmul.f32 %v295, %v672
        %v679 = vrot.slane %v673, 2
        %v680 = vrot.slane %v674, 2
        %v681 = vsel %vm339, %v679, %v680
        %v682 = vrot.slane %v675, 2
        %v683 = vsel %vm339, %v680, %v682
        %684 = vrot.lane.b32.xlu0 %v681, 124
        %v685 = vpop.permute.xlu0 %684
        %686 = vrot.lane.b32.xlu0 %v683, 124
        %v687 = vpop.permute.xlu0 %686
        %v690 = vadd.f32 %v669, %v685
        %v691 = vadd.f32 %v670, %v687
        %s692 = sld [smem:[#allocation7 + $0x106]]
        %v693 = vstv %s692
        %v694 = vmul.f32 %v293, %v693
        %v695 = vmul.f32 %v294, %v693
        %v696 = vmul.f32 %v295, %v693
        %v700 = vrot.slane %v694, 4
        %v701 = vrot.slane %v695, 4
        %v702 = vsel %vm399, %v700, %v701
        %v703 = vrot.slane %v696, 4
        %v704 = vsel %vm399, %v701, %v703
        %v707 = vadd.f32 %v690, %v702
        %v708 = vadd.f32 %v691, %v704
        %s709 = sld [smem:[#allocation7 + $0x107]]
        %v710 = vstv %s709
        %v711 = vmul.f32 %v293, %v710
        %v712 = vmul.f32 %v294, %v710
        %v713 = vmul.f32 %v295, %v710
        %v717 = vrot.slane %v711, 4
        %v718 = vrot.slane %v712, 4
        %v719 = vsel %vm399, %v717, %v718
        %v720 = vrot.slane %v713, 4
        %v721 = vsel %vm399, %v718, %v720
        %722 = vrot.lane.b32.xlu0 %v719, 126
        %v723 = vpop.permute.xlu0 %722
        %724 = vrot.lane.b32.xlu0 %v721, 126
        %v725 = vpop.permute.xlu0 %724
        %v728 = vadd.f32 %v707, %v723
        %v729 = vadd.f32 %v708, %v725
        %s730 = sld [smem:[#allocation7 + $0x108]]
        %v731 = vstv %s730
        %v732 = vmul.f32 %v293, %v731
        %v733 = vmul.f32 %v294, %v731
        %v734 = vmul.f32 %v295, %v731
        %v738 = vrot.slane %v732, 4
        %v739 = vrot.slane %v733, 4
        %v740 = vsel %vm399, %v738, %v739
        %v741 = vrot.slane %v734, 4
        %v742 = vsel %vm399, %v739, %v741
        %743 = vrot.lane.b32.xlu0 %v740, 124
        %v744 = vpop.permute.xlu0 %743
        %745 = vrot.lane.b32.xlu0 %v742, 124
        %v746 = vpop.permute.xlu0 %745
        %v749 = vadd.f32 %v728, %v744
        %v750 = vadd.f32 %v729, %v746
        %s751 = sld [smem:[#allocation7 + $0x180]]
        %v752 = vstv %s751
        %v753 = vmul.f32 %v296, %v752
        %v754 = vmul.f32 %v297, %v752
        %s755 = sld [smem:[#allocation7 + $0x181]]
        %v756 = vstv %s755
        %v757 = vmul.f32 %v296, %v756
        %v758 = vmul.f32 %v297, %v756
        %761 = vrot.lane.b32.xlu0 %v757, 126
        %v762 = vpop.permute.xlu0 %761
        %763 = vrot.lane.b32.xlu0 %v758, 126
        %v764 = vpop.permute.xlu0 %763
        %v767 = vadd.f32 %v753, %v762
        %v768 = vadd.f32 %v754, %v764
        %s769 = sld [smem:[#allocation7 + $0x182]]
        %v770 = vstv %s769
        %v771 = vmul.f32 %v296, %v770
        %v772 = vmul.f32 %v297, %v770
        %775 = vrot.lane.b32.xlu0 %v771, 124
        %v776 = vpop.permute.xlu0 %775
        %777 = vrot.lane.b32.xlu0 %v772, 124
        %v778 = vpop.permute.xlu0 %777
        %v781 = vadd.f32 %v767, %v776
        %v782 = vadd.f32 %v768, %v778
        %s783 = sld [smem:[#allocation7 + $0x183]]
        %v784 = vstv %s783
        %v785 = vmul.f32 %v296, %v784
        %v786 = vmul.f32 %v297, %v784
        %v787 = vmul.f32 %v298, %v784
        %v791 = vrot.slane %v785, 2
        %v792 = vrot.slane %v786, 2
        %v793 = vsel %vm339, %v791, %v792
        %v794 = vrot.slane %v787, 2
        %v795 = vsel %vm339, %v792, %v794
        %v798 = vadd.f32 %v781, %v793
        %v799 = vadd.f32 %v782, %v795
        %s800 = sld [smem:[#allocation7 + $0x184]]
        %v801 = vstv %s800
        %v802 = vmul.f32 %v296, %v801
        %v803 = vmul.f32 %v297, %v801
        %v804 = vmul.f32 %v298, %v801
        %v808 = vrot.slane %v802, 2
        %v809 = vrot.slane %v803, 2
        %v810 = vsel %vm339, %v808, %v809
        %v811 = vrot.slane %v804, 2
        %v812 = vsel %vm339, %v809, %v811
        %813 = vrot.lane.b32.xlu0 %v810, 126
        %v814 = vpop.permute.xlu0 %813
        %815 = vrot.lane.b32.xlu0 %v812, 126
        %v816 = vpop.permute.xlu0 %815
        %v819 = vadd.f32 %v798, %v814
        %v820 = vadd.f32 %v799, %v816
        %s821 = sld [smem:[#allocation7 + $0x185]]
        %v822 = vstv %s821
        %v823 = vmul.f32 %v296, %v822
        %v824 = vmul.f32 %v297, %v822
        %v825 = vmul.f32 %v298, %v822
        %v829 = vrot.slane %v823, 2
        %v830 = vrot.slane %v824, 2
        %v831 = vsel %vm339, %v829, %v830
        %v832 = vrot.slane %v825, 2
        %v833 = vsel %vm339, %v830, %v832
        %834 = vrot.lane.b32.xlu0 %v831, 124
        %v835 = vpop.permute.xlu0 %834
        %836 = vrot.lane.b32.xlu0 %v833, 124
        %v837 = vpop.permute.xlu0 %836
        %v840 = vadd.f32 %v819, %v835
        %v841 = vadd.f32 %v820, %v837
        %s842 = sld [smem:[#allocation7 + $0x186]]
        %v843 = vstv %s842
        %v844 = vmul.f32 %v296, %v843
        %v845 = vmul.f32 %v297, %v843
        %v846 = vmul.f32 %v298, %v843
        %v850 = vrot.slane %v844, 4
        %v851 = vrot.slane %v845, 4
        %v852 = vsel %vm399, %v850, %v851
        %v853 = vrot.slane %v846, 4
        %v854 = vsel %vm399, %v851, %v853
        %v857 = vadd.f32 %v840, %v852
        %v858 = vadd.f32 %v841, %v854
        %s859 = sld [smem:[#allocation7 + $0x187]]
        %v860 = vstv %s859
        %v861 = vmul.f32 %v296, %v860
        %v862 = vmul.f32 %v297, %v860
        %v863 = vmul.f32 %v298, %v860
        %v867 = vrot.slane %v861, 4
        %v868 = vrot.slane %v862, 4
        %v869 = vsel %vm399, %v867, %v868
        %v870 = vrot.slane %v863, 4
        %v871 = vsel %vm399, %v868, %v870
        %872 = vrot.lane.b32.xlu0 %v869, 126
        %v873 = vpop.permute.xlu0 %872
        %874 = vrot.lane.b32.xlu0 %v871, 126
        %v875 = vpop.permute.xlu0 %874
        %v878 = vadd.f32 %v857, %v873
        %v879 = vadd.f32 %v858, %v875
        %s880 = sld [smem:[#allocation7 + $0x188]]
        %v881 = vstv %s880
        %v882 = vmul.f32 %v296, %v881
        %v883 = vmul.f32 %v297, %v881
        %v884 = vmul.f32 %v298, %v881
        %v888 = vrot.slane %v882, 4
        %v889 = vrot.slane %v883, 4
        %v890 = vsel %vm399, %v888, %v889
        %v891 = vrot.slane %v884, 4
        %v892 = vsel %vm399, %v889, %v891
        %893 = vrot.lane.b32.xlu0 %v890, 124
        %v894 = vpop.permute.xlu0 %893
        %895 = vrot.lane.b32.xlu0 %v892, 124
        %v896 = vpop.permute.xlu0 %895
        %v899 = vadd.f32 %v878, %v894
        %v900 = vadd.f32 %v879, %v896
        %s901 = sld [smem:[#allocation8]]
        %v902 = vstv %s901
        %v903 = vmul.f32 %v449, %v902
        %v904 = vmul.f32 %v450, %v902
        %s905 = sld [smem:[#allocation8 + $0x1]]
        %v906 = vstv %s905
        %v907 = vmul.f32 %v599, %v906
        %v908 = vmul.f32 %v600, %v906
        %v909 = vadd.f32 %v903, %v907
        %v910 = vadd.f32 %v904, %v908
        %s911 = sld [smem:[#allocation8 + $0x2]]
        %v912 = vstv %s911
        %v913 = vmul.f32 %v749, %v912
        %v914 = vmul.f32 %v750, %v912
        %v915 = vadd.f32 %v909, %v913
        %v916 = vadd.f32 %v910, %v914
        %s917 = sld [smem:[#allocation8 + $0x3]]
        %v918 = vstv %s917
        %v919 = vmul.f32 %v899, %v918
        %v920 = vmul.f32 %v900, %v918
        %v921 = vadd.f32 %v915, %v919
        %v922 = vadd.f32 %v916, %v920
        %s923 = sld [smem:[#allocation8 + $0x80]]
        %v924 = vstv %s923
        %v925 = vmul.f32 %v449, %v924
        %v926 = vmul.f32 %v450, %v924
        %s927 = sld [smem:[#allocation8 + $0x81]]
        %v928 = vstv %s927
        %v929 = vmul.f32 %v599, %v928
        %v930 = vmul.f32 %v600, %v928
        %v931 = vadd.f32 %v925, %v929
        %v932 = vadd.f32 %v926, %v930
        %s933 = sld [smem:[#allocation8 + $0x82]]
        %v934 = vstv %s933
        %v935 = vmul.f32 %v749, %v934
        %v936 = vmul.f32 %v750, %v934
        %v937 = vadd.f32 %v931, %v935
        %v938 = vadd.f32 %v932, %v936
        %s939 = sld [smem:[#allocation8 + $0x83]]
        %v940 = vstv %s939
        %v941 = vmul.f32 %v899, %v940
        %v942 = vmul.f32 %v900, %v940
        %v943 = vadd.f32 %v937, %v941
        %v944 = vadd.f32 %v938, %v942
        %s945 = sld [smem:[#allocation8 + $0x100]]
        %v946 = vstv %s945
        %v947 = vmul.f32 %v449, %v946
        %v948 = vmul.f32 %v450, %v946
        %s949 = sld [smem:[#allocation8 + $0x101]]
        %v950 = vstv %s949
        %v951 = vmul.f32 %v599, %v950
        %v952 = vmul.f32 %v600, %v950
        %v953 = vadd.f32 %v947, %v951
        %v954 = vadd.f32 %v948, %v952
        %s955 = sld [smem:[#allocation8 + $0x102]]
        %v956 = vstv %s955
        %v957 = vmul.f32 %v749, %v956
        %v958 = vmul.f32 %v750, %v956
        %v959 = vadd.f32 %v953, %v957
        %v960 = vadd.f32 %v954, %v958
        %s961 = sld [smem:[#allocation8 + $0x103]]
        %v962 = vstv %s961
        %v963 = vmul.f32 %v899, %v962
        %v964 = vmul.f32 %v900, %v962
        %v965 = vadd.f32 %v959, %v963
        %v966 = vadd.f32 %v960, %v964
        %s967 = sld [smem:[#allocation8 + $0x180]]
        %v968 = vstv %s967
        %v969 = vmul.f32 %v449, %v968
        %v970 = vmul.f32 %v450, %v968
        %s971 = sld [smem:[#allocation8 + $0x181]]
        %v972 = vstv %s971
        %v973 = vmul.f32 %v599, %v972
        %v974 = vmul.f32 %v600, %v972
        %v975 = vadd.f32 %v969, %v973
        %v976 = vadd.f32 %v970, %v974
        %s977 = sld [smem:[#allocation8 + $0x182]]
        %v978 = vstv %s977
        %v979 = vmul.f32 %v749, %v978
        %v980 = vmul.f32 %v750, %v978
        %v981 = vadd.f32 %v975, %v979
        %v982 = vadd.f32 %v976, %v980
        %s983 = sld [smem:[#allocation8 + $0x183]]
        %v984 = vstv %s983
        %v985 = vmul.f32 %v899, %v984
        %v986 = vmul.f32 %v900, %v984
        %v987 = vadd.f32 %v981, %v985
        %v988 = vadd.f32 %v982, %v986
        %s989 = sld [smem:[#allocation8 + $0x200]]
        %v990 = vstv %s989
        %v991 = vmul.f32 %v449, %v990
        %v992 = vmul.f32 %v450, %v990
        %s993 = sld [smem:[#allocation8 + $0x201]]
        %v994 = vstv %s993
        %v995 = vmul.f32 %v599, %v994
        %v996 = vmul.f32 %v600, %v994
        %v997 = vadd.f32 %v991, %v995
        %v998 = vadd.f32 %v992, %v996
        %s999 = sld [smem:[#allocation8 + $0x202]]
        %v1000 = vstv %s999
        %v1001 = vmul.f32 %v749, %v1000
        %v1002 = vmul.f32 %v750, %v1000
        %v1003 = vadd.f32 %v997, %v1001
        %v1004 = vadd.f32 %v998, %v1002
        %s1005 = sld [smem:[#allocation8 + $0x203]]
        %v1006 = vstv %s1005
        %v1007 = vmul.f32 %v899, %v1006
        %v1008 = vmul.f32 %v900, %v1006
        %v1009 = vadd.f32 %v1003, %v1007
        %v1010 = vadd.f32 %v1004, %v1008
        %s1011 = sld [smem:[#allocation8 + $0x280]]
        %v1012 = vstv %s1011
        %v1013 = vmul.f32 %v449, %v1012
        %v1014 = vmul.f32 %v450, %v1012
        %s1015 = sld [smem:[#allocation8 + $0x281]]
        %v1016 = vstv %s1015
        %v1017 = vmul.f32 %v599, %v1016
        %v1018 = vmul.f32 %v600, %v1016
        %v1019 = vadd.f32 %v1013, %v1017
        %v1020 = vadd.f32 %v1014, %v1018
        %s1021 = sld [smem:[#allocation8 + $0x282]]
        %v1022 = vstv %s1021
        %v1023 = vmul.f32 %v749, %v1022
        %v1024 = vmul.f32 %v750, %v1022
        %v1025 = vadd.f32 %v1019, %v1023
        %v1026 = vadd.f32 %v1020, %v1024
        %s1027 = sld [smem:[#allocation8 + $0x283]]
        %v1028 = vstv %s1027
        %v1029 = vmul.f32 %v899, %v1028
        %v1030 = vmul.f32 %v900, %v1028
        %v1031 = vadd.f32 %v1025, %v1029
        %v1032 = vadd.f32 %v1026, %v1030
        %s1033 = sld [smem:[#allocation8 + $0x300]]
        %v1034 = vstv %s1033
        %v1035 = vmul.f32 %v449, %v1034
        %v1036 = vmul.f32 %v450, %v1034
        %s1037 = sld [smem:[#allocation8 + $0x301]]
        %v1038 = vstv %s1037
        %v1039 = vmul.f32 %v599, %v1038
        %v1040 = vmul.f32 %v600, %v1038
        %v1041 = vadd.f32 %v1035, %v1039
        %v1042 = vadd.f32 %v1036, %v1040
        %s1043 = sld [smem:[#allocation8 + $0x302]]
        %v1044 = vstv %s1043
        %v1045 = vmul.f32 %v749, %v1044
        %v1046 = vmul.f32 %v750, %v1044
        %v1047 = vadd.f32 %v1041, %v1045
        %v1048 = vadd.f32 %v1042, %v1046
        %s1049 = sld [smem:[#allocation8 + $0x303]]
        %v1050 = vstv %s1049
        %v1051 = vmul.f32 %v899, %v1050
        %v1052 = vmul.f32 %v900, %v1050
        %v1053 = vadd.f32 %v1047, %v1051
        %v1054 = vadd.f32 %v1048, %v1052
        %s1055 = sld [smem:[#allocation8 + $0x380]]
        %v1056 = vstv %s1055
        %v1057 = vmul.f32 %v449, %v1056
        %v1058 = vmul.f32 %v450, %v1056
        %s1059 = sld [smem:[#allocation8 + $0x381]]
        %v1060 = vstv %s1059
        %v1061 = vmul.f32 %v599, %v1060
        %v1062 = vmul.f32 %v600, %v1060
        %v1063 = vadd.f32 %v1057, %v1061
        %v1064 = vadd.f32 %v1058, %v1062
        %s1065 = sld [smem:[#allocation8 + $0x382]]
        %v1066 = vstv %s1065
        %v1067 = vmul.f32 %v749, %v1066
        %v1068 = vmul.f32 %v750, %v1066
        %v1069 = vadd.f32 %v1063, %v1067
        %v1070 = vadd.f32 %v1064, %v1068
        %s1071 = sld [smem:[#allocation8 + $0x383]]
        %v1072 = vstv %s1071
        %v1073 = vmul.f32 %v899, %v1072
        %v1074 = vmul.f32 %v900, %v1072
        %v1075 = vadd.f32 %v1069, %v1073
        %v1076 = vadd.f32 %v1070, %v1074
        %vm1077 = vcmask 130048
        %v1078 = vsel %vm1077, %v921, 0.0
        %v1079 = vsel %vm1077, %v922, 0.0
        %v1080 = vadd.f32 %v1078, %v1079
        %v1081 = vrot.slane %v1080, 4
        %v1082 = vadd.f32 %v1080, %v1081
        %v1083 = vrot.slane %v1082, 2
        %v1084 = vadd.f32 %v1082, %v1083
        %v1085 = vrot.slane %v1084, 1
        %v1086 = vadd.f32 %v1084, %v1085
        %v1087 = vadd.f32 %v1086, 0.0
        %v1088 = vmul.f32 %v921, %v921
        %v1089 = vmul.f32 %v922, %v922
        %v1090 = vsel %vm1077, %v1088, 0.0
        %v1091 = vsel %vm1077, %v1089, 0.0
        %v1092 = vadd.f32 %v1090, %v1091
        %v1093 = vrot.slane %v1092, 4
        %v1094 = vadd.f32 %v1092, %v1093
        %v1095 = vrot.slane %v1094, 2
        %v1096 = vadd.f32 %v1094, %v1095
        %v1097 = vrot.slane %v1096, 1
        %v1098 = vadd.f32 %v1096, %v1097
        %v1099 = vadd.f32 %v1098, 0.0
        %v1100 = vsel %vm1077, %v943, 0.0
        %v1101 = vsel %vm1077, %v944, 0.0
        %v1102 = vadd.f32 %v1100, %v1101
        %v1103 = vrot.slane %v1102, 4
        %v1104 = vadd.f32 %v1102, %v1103
        %v1105 = vrot.slane %v1104, 2
        %v1106 = vadd.f32 %v1104, %v1105
        %v1107 = vrot.slane %v1106, 1
        %v1108 = vadd.f32 %v1106, %v1107
        %v1109 = vadd.f32 %v1108, 0.0
        %v1110 = vmul.f32 %v943, %v943
        %v1111 = vmul.f32 %v944, %v944
        %v1112 = vsel %vm1077, %v1110, 0.0
        %v1113 = vsel %vm1077, %v1111, 0.0
        %v1114 = vadd.f32 %v1112, %v1113
        %v1115 = vrot.slane %v1114, 4
        %v1116 = vadd.f32 %v1114, %v1115
        %v1117 = vrot.slane %v1116, 2
        %v1118 = vadd.f32 %v1116, %v1117
        %v1119 = vrot.slane %v1118, 1
        %v1120 = vadd.f32 %v1118, %v1119
        %v1121 = vadd.f32 %v1120, 0.0
        %v1122 = vsel %vm1077, %v965, 0.0
        %v1123 = vsel %vm1077, %v966, 0.0
        %v1124 = vadd.f32 %v1122, %v1123
        %v1125 = vrot.slane %v1124, 4
        %v1126 = vadd.f32 %v1124, %v1125
        %v1127 = vrot.slane %v1126, 2
        %v1128 = vadd.f32 %v1126, %v1127
        %v1129 = vrot.slane %v1128, 1
        %v1130 = vadd.f32 %v1128, %v1129
        %v1131 = vadd.f32 %v1130, 0.0
        %v1132 = vmul.f32 %v965, %v965
        %v1133 = vmul.f32 %v966, %v966
        %v1134 = vsel %vm1077, %v1132, 0.0
        %v1135 = vsel %vm1077, %v1133, 0.0
        %v1136 = vadd.f32 %v1134, %v1135
        %v1137 = vrot.slane %v1136, 4
        %v1138 = vadd.f32 %v1136, %v1137
        %v1139 = vrot.slane %v1138, 2
        %v1140 = vadd.f32 %v1138, %v1139
        %v1141 = vrot.slane %v1140, 1
        %v1142 = vadd.f32 %v1140, %v1141
        %v1143 = vadd.f32 %v1142, 0.0
        %v1144 = vsel %vm1077, %v987, 0.0
        %v1145 = vsel %vm1077, %v988, 0.0
        %v1146 = vadd.f32 %v1144, %v1145
        %v1147 = vrot.slane %v1146, 4
        %v1148 = vadd.f32 %v1146, %v1147
        %v1149 = vrot.slane %v1148, 2
        %v1150 = vadd.f32 %v1148, %v1149
        %v1151 = vrot.slane %v1150, 1
        %v1152 = vadd.f32 %v1150, %v1151
        %v1153 = vadd.f32 %v1152, 0.0
        %v1154 = vmul.f32 %v987, %v987
        %v1155 = vmul.f32 %v988, %v988
        %v1156 = vsel %vm1077, %v1154, 0.0
        %v1157 = vsel %vm1077, %v1155, 0.0
        %v1158 = vadd.f32 %v1156, %v1157
        %v1159 = vrot.slane %v1158, 4
        %v1160 = vadd.f32 %v1158, %v1159
        %v1161 = vrot.slane %v1160, 2
        %v1162 = vadd.f32 %v1160, %v1161
        %v1163 = vrot.slane %v1162, 1
        %v1164 = vadd.f32 %v1162, %v1163
        %v1165 = vadd.f32 %v1164, 0.0
        %v1166 = vsel %vm1077, %v1009, 0.0
        %v1167 = vsel %vm1077, %v1010, 0.0
        %v1168 = vadd.f32 %v1166, %v1167
        %v1169 = vrot.slane %v1168, 4
        %v1170 = vadd.f32 %v1168, %v1169
        %v1171 = vrot.slane %v1170, 2
        %v1172 = vadd.f32 %v1170, %v1171
        %v1173 = vrot.slane %v1172, 1
        %v1174 = vadd.f32 %v1172, %v1173
        %v1175 = vadd.f32 %v1174, 0.0
        %v1176 = vmul.f32 %v1009, %v1009
        %v1177 = vmul.f32 %v1010, %v1010
        %v1178 = vsel %vm1077, %v1176, 0.0
        %v1179 = vsel %vm1077, %v1177, 0.0
        %v1180 = vadd.f32 %v1178, %v1179
        %v1181 = vrot.slane %v1180, 4
        %v1182 = vadd.f32 %v1180, %v1181
        %v1183 = vrot.slane %v1182, 2
        %v1184 = vadd.f32 %v1182, %v1183
        %v1185 = vrot.slane %v1184, 1
        %v1186 = vadd.f32 %v1184, %v1185
        %v1187 = vadd.f32 %v1186, 0.0
        %v1188 = vsel %vm1077, %v1031, 0.0
        %v1189 = vsel %vm1077, %v1032, 0.0
        %v1190 = vadd.f32 %v1188, %v1189
        %v1191 = vrot.slane %v1190, 4
        %v1192 = vadd.f32 %v1190, %v1191
        %v1193 = vrot.slane %v1192, 2
        %v1194 = vadd.f32 %v1192, %v1193
        %v1195 = vrot.slane %v1194, 1
        %v1196 = vadd.f32 %v1194, %v1195
        %v1197 = vadd.f32 %v1196, 0.0
        %v1198 = vmul.f32 %v1031, %v1031
        %v1199 = vmul.f32 %v1032, %v1032
        %v1200 = vsel %vm1077, %v1198, 0.0
        %v1201 = vsel %vm1077, %v1199, 0.0
        %v1202 = vadd.f32 %v1200, %v1201
        %v1203 = vrot.slane %v1202, 4
        %v1204 = vadd.f32 %v1202, %v1203
        %v1205 = vrot.slane %v1204, 2
        %v1206 = vadd.f32 %v1204, %v1205
        %v1207 = vrot.slane %v1206, 1
        %v1208 = vadd.f32 %v1206, %v1207
        %v1209 = vadd.f32 %v1208, 0.0
        %v1210 = vsel %vm1077, %v1053, 0.0
        %v1211 = vsel %vm1077, %v1054, 0.0
        %v1212 = vadd.f32 %v1210, %v1211
        %v1213 = vrot.slane %v1212, 4
        %v1214 = vadd.f32 %v1212, %v1213
        %v1215 = vrot.slane %v1214, 2
        %v1216 = vadd.f32 %v1214, %v1215
        %v1217 = vrot.slane %v1216, 1
        %v1218 = vadd.f32 %v1216, %v1217
        %v1219 = vadd.f32 %v1218, 0.0
        %v1220 = vmul.f32 %v1053, %v1053
        %v1221 = vmul.f32 %v1054, %v1054
        %v1222 = vsel %vm1077, %v1220, 0.0
        %v1223 = vsel %vm1077, %v1221, 0.0
        %v1224 = vadd.f32 %v1222, %v1223
        %v1225 = vrot.slane %v1224, 4
        %v1226 = vadd.f32 %v1224, %v1225
        %v1227 = vrot.slane %v1226, 2
        %v1228 = vadd.f32 %v1226, %v1227
        %v1229 = vrot.slane %v1228, 1
        %v1230 = vadd.f32 %v1228, %v1229
        %v1231 = vadd.f32 %v1230, 0.0
        %v1232 = vsel %vm1077, %v1075, 0.0
        %v1233 = vsel %vm1077, %v1076, 0.0
        %v1234 = vadd.f32 %v1232, %v1233
        %v1235 = vrot.slane %v1234, 4
        %v1236 = vadd.f32 %v1234, %v1235
        %v1237 = vrot.slane %v1236, 2
        %v1238 = vadd.f32 %v1236, %v1237
        %v1239 = vrot.slane %v1238, 1
        %v1240 = vadd.f32 %v1238, %v1239
        %v1241 = vadd.f32 %v1240, 0.0
        %v1242 = vmul.f32 %v1075, %v1075
        %v1243 = vmul.f32 %v1076, %v1076
        %v1244 = vsel %vm1077, %v1242, 0.0
        %v1245 = vsel %vm1077, %v1243, 0.0
        %v1246 = vadd.f32 %v1244, %v1245
        %v1247 = vrot.slane %v1246, 4
        %v1248 = vadd.f32 %v1246, %v1247
        %v1249 = vrot.slane %v1248, 2
        %v1250 = vadd.f32 %v1248, %v1249
        %v1251 = vrot.slane %v1250, 1
        %v1252 = vadd.f32 %v1250, %v1251
        %v1253 = vadd.f32 %v1252, 0.0
        %vm1254 = vcmask 122880
        %1255 = vst.msk [vmem:[%s215] sm:$0x1] %vm1254, %v1087
        %1256 = vst.msk [vmem:[%s215 + $0x1] sm:$0x1] %vm1254, %v1099
        %s1257 = scalar_lea.vmem %s215, 2 [#allocation10]
        %1258 = vst.msk [vmem:[%s1257] sm:$0x1] %vm1254, %v1109
        %1259 = vst.msk [vmem:[%s1257 + $0x1] sm:$0x1] %vm1254, %v1121
        %s1260 = scalar_lea.vmem %s215, 4 [#allocation10]
        %1261 = vst.msk [vmem:[%s1260] sm:$0x1] %vm1254, %v1131
        %1262 = vst.msk [vmem:[%s1260 + $0x1] sm:$0x1] %vm1254, %v1143
        %s1263 = scalar_lea.vmem %s215, 6 [#allocation10]
        %1264 = vst.msk [vmem:[%s1263] sm:$0x1] %vm1254, %v1153
        %1265 = vst.msk [vmem:[%s1263 + $0x1] sm:$0x1] %vm1254, %v1165
        %s1266 = scalar_lea.vmem %s215, 8 [#allocation10]
        %1267 = vst.msk [vmem:[%s1266] sm:$0x1] %vm1254, %v1175
        %1268 = vst.msk [vmem:[%s1266 + $0x1] sm:$0x1] %vm1254, %v1187
        %s1269 = scalar_lea.vmem %s215, 10 [#allocation10]
        %1270 = vst.msk [vmem:[%s1269] sm:$0x1] %vm1254, %v1197
        %1271 = vst.msk [vmem:[%s1269 + $0x1] sm:$0x1] %vm1254, %v1209
        %s1272 = scalar_lea.vmem %s215, 12 [#allocation10]
        %1273 = vst.msk [vmem:[%s1272] sm:$0x1] %vm1254, %v1219
        %1274 = vst.msk [vmem:[%s1272 + $0x1] sm:$0x1] %vm1254, %v1231
        %s1275 = scalar_lea.vmem %s215, 14 [#allocation10]
        %1276 = vst.msk [vmem:[%s1275] sm:$0x1] %vm1254, %v1241
        %1277 = vst.msk [vmem:[%s1275 + $0x1] sm:$0x1] %vm1254, %v1253
        %s1278 = sand.u32 %s98, 1
        %s1279 = scalar_lea.sflag [#allocation5], %s1278
        %s1280 = sand.u32 %s98, 1
        %s1281 = smul.addr %s1280, 16
        %s1282 = scalar_lea.vmem [#allocation10], %s1281
        // Predicated region
        $region45: #{tpu_custom_call.1} parent=31 // pred_check
          %p1283 = pneg %p108
        $region46: #{tpu_custom_call.1} parent=31 // pred_check_branch
          %1285 = sbr.rel (%p1283) target = $region48
        $region47: #{tpu_custom_call.1} parent=31 // pred_region
          %s1287 = ssub.s32 256, 256
          %1288 = vsyncadd %s1279, %s1287
          %s1289 = smul.addr %s22, 8
          %s1290 = smul.addr %s1289, 32
          %s1291 = scalar_lea.hbm %s3, %s1290
          %s1292 = sshll.u32 %s1282, 4
          %s1293 = int_to_ptr.vmem [resolvable:$true] %s1292
          %1298 = dma.vmem_to_hbm [thread:$0]  %s1293, 256, %s1291, %s1279, 32, 32, 2
        $region48: #{tpu_custom_call.1} parent=31 // pred_fallthru
          _
      $region32: #{tpu_custom_call.1} parent=5 // pred_fallthru
        _
      %p1299 = scmp.le.s32.totalorder 2, %s17
      // Predicated region
      $region49: #{tpu_custom_call.1} parent=5 // pred_check
        %p1300 = pneg %p1299
      $region50: #{tpu_custom_call.1} parent=5 // pred_check_branch
        %1302 = sbr.rel (%p1300) target = $region52
      $region51: #{tpu_custom_call.1} parent=5 // pred_region
        %s1303 = ssub.s32 %s17, 2
        // Predicated region
        $region53: #{tpu_custom_call.1} parent=51 // pred_check
          %p1304 = pneg %p114
        $region54: #{tpu_custom_call.1} parent=51 // pred_check_branch
          %1306 = sbr.rel (%p1304) target = $region56
        $region55: #{tpu_custom_call.1} parent=51 // pred_region
          %s1307 = sand.u32 %s99, 1
          %s1308 = scalar_lea.sflag [#allocation5], %s1307
          %s1309 = sand.u32 %s99, 1
          %s1310 = smul.addr %s1309, 16
          %s1311 = scalar_lea.vmem [#allocation10], %s1310
          %1312 = dma.done %s1308, 256
        $region56: #{tpu_custom_call.1} parent=51 // pred_fallthru
          _
      $region52: #{tpu_custom_call.1} parent=5 // pred_fallthru
        _
    $region6: #{tpu_custom_call.1} parent=1 // loop_footer
      %s21 = sadd.s32 1, %s17
    $region7: #{tpu_custom_call.1} parent=1 // loop_footer_branch
      %16 = sbr.rel target = $region3
    $region8: #{tpu_custom_call.1} parent=1 // loop_exit
      _
    %1313 = vsyncpa [#allocation4], 1
    %s1314 = scalar_lea.sflag [#allocation4], 1
    %1315 = vsyncpa %s1314, 1
    %1316 = vsyncpa [#allocation5], 1
    %s1317 = scalar_lea.sflag [#allocation5], 1
    %1318 = vsyncpa %s1317, 1
    %1319 = vsyncpa [#allocation6], 1
    %s1320 = scalar_lea.sflag [#allocation6], 1
    %1321 = vsyncpa %s1320, 1
    %1322 = vsyncpa [#allocation9], 1

</llo_original>
